<compile_context>
chip_gen: v5e
topology: v5e:2x2
jax: 0.10.0
libtpu: 0.0.40
codegen_flags: <defaults>
</compile_context>

<pallas_src>
import jax
import jax.numpy as jnp
from jax.experimental import pallas as pl
from jax.experimental.pallas import tpu as pltpu


_VMEM_LIMIT_BYTES = 48 * 1024 * 1024  # fits v7x's 64 MiB VMEM, > v5e's 16 MiB scoped default


def _round_up(x, m):
    return ((x + m - 1) // m) * m


def _pick_tm(mp):
    # mp is a multiple of 128, so this always returns a divisor of mp.
    for t in (2048, 1024, 512, 256, 128):
        if mp % t == 0:
            return t
    return 128


def _compiler_params():
    return pltpu.CompilerParams(
        dimension_semantics=("parallel", "parallel"),
        vmem_limit_bytes=_VMEM_LIMIT_BYTES,
    )


# ----------------------------------------------------------------------------- kernels
def _fusion1_kernel(p_ref, w_ref, b_ref, a_ref, o_ref):
    # p:(K,tm) bf16, w:(30,K) bf16 (BN scale folded), b/a:(30,1) f32, o:(30,tm) f32
    z = jnp.dot(w_ref[...], p_ref[...], preferred_element_type=jnp.float32)
    z = z + b_ref[...]
    o_ref[...] = jnp.where(z >= 0.0, z, a_ref[...] * z).astype(o_ref.dtype)


def _fusion2_first_kernel(px_ref, py_ref, wt_ref, wb_ref, b_ref, a_ref,
                          o_ref, part_ref):
    # x2 = PReLU(w_top @ im2col(x1) + w_bot @ im2col(y1) + b); also emit the
    # reusable y1 partial so cat(x1,y1)/cat(x2,y1) never exist in HBM.
    part = jnp.dot(wb_ref[...], py_ref[...], preferred_element_type=jnp.float32)
    z = jnp.dot(wt_ref[...], px_ref[...], preferred_element_type=jnp.float32)
    z = z + part + b_ref[...]
    o_ref[...] = jnp.where(z >= 0.0, z, a_ref[...] * z).astype(o_ref.dtype)
    part_ref[...] = part.astype(part_ref.dtype)


def _fusion2_second_kernel(px_ref, wt_ref, part_ref, b_ref, a_ref, y_ref, o_ref):
    # x3 = PReLU(w_top @ im2col(x2) + part_y + b); fused final cat(x3, y1):
    # o is (2, 30, tm) channel-major -> reshapes for free to NCHW outside.
    z = jnp.dot(wt_ref[...], px_ref[...], preferred_element_type=jnp.float32)
    z = z + part_ref[...] + b_ref[...]
    z = jnp.where(z >= 0.0, z, a_ref[...] * z)
    o_ref[0, :, :] = z.astype(o_ref.dtype)
    o_ref[1, :, :] = y_ref[...].astype(o_ref.dtype)


# ----------------------------------------------------------------------------- pallas_call wrappers
def _fusion1_call(patches, wmat, bias, alpha, tm):
    b, k, mp = patches.shape
    cout = wmat.shape[0]
    return pl.pallas_call(
        _fusion1_kernel,
        out_shape=jax.ShapeDtypeStruct((b, cout, mp), jnp.float32),
        grid_spec=pltpu.PrefetchScalarGridSpec(
            num_scalar_prefetch=0,
            grid=(b, mp // tm),
            in_specs=[
                pl.BlockSpec((pl.Squeezed(), k, tm), lambda n, m: (n, 0, m)),
                pl.BlockSpec((cout, k), lambda n, m: (0, 0)),
                pl.BlockSpec((cout, 1), lambda n, m: (0, 0)),
                pl.BlockSpec((cout, 1), lambda n, m: (0, 0)),
            ],
            out_specs=pl.BlockSpec((pl.Squeezed(), cout, tm), lambda n, m: (n, 0, m)),
        ),
        compiler_params=_compiler_params(),
    )(patches, wmat, bias, alpha)


def _fusion2_first_call(px, py, wt, wb, bias, alpha, tm):
    n, k, mp = px.shape
    cout = wt.shape[0]
    return pl.pallas_call(
        _fusion2_first_kernel,
        out_shape=(jax.ShapeDtypeStruct((n, cout, mp), jnp.float32),
                   jax.ShapeDtypeStruct((n, cout, mp), jnp.float32)),
        grid_spec=pltpu.PrefetchScalarGridSpec(
            num_scalar_prefetch=0,
            grid=(n, mp // tm),
            in_specs=[
                pl.BlockSpec((pl.Squeezed(), k, tm), lambda b, m: (b, 0, m)),
                pl.BlockSpec((pl.Squeezed(), k, tm), lambda b, m: (b, 0, m)),
                pl.BlockSpec((cout, k), lambda b, m: (0, 0)),
                pl.BlockSpec((cout, k), lambda b, m: (0, 0)),
                pl.BlockSpec((cout, 1), lambda b, m: (0, 0)),
                pl.BlockSpec((cout, 1), lambda b, m: (0, 0)),
            ],
            out_specs=(
                pl.BlockSpec((pl.Squeezed(), cout, tm), lambda b, m: (b, 0, m)),
                pl.BlockSpec((pl.Squeezed(), cout, tm), lambda b, m: (b, 0, m)),
            ),
        ),
        compiler_params=_compiler_params(),
    )(px, py, wt, wb, bias, alpha)


def _fusion2_second_call(px, wt, part, bias, alpha, y1, tm):
    n, k, mp = px.shape
    cout = wt.shape[0]
    return pl.pallas_call(
        _fusion2_second_kernel,
        out_shape=jax.ShapeDtypeStruct((n, 2, cout, mp), jnp.float32),
        grid_spec=pltpu.PrefetchScalarGridSpec(
            num_scalar_prefetch=0,
            grid=(n, mp // tm),
            in_specs=[
                pl.BlockSpec((pl.Squeezed(), k, tm), lambda b, m: (b, 0, m)),
                pl.BlockSpec((cout, k), lambda b, m: (0, 0)),
                pl.BlockSpec((pl.Squeezed(), cout, tm), lambda b, m: (b, 0, m)),
                pl.BlockSpec((cout, 1), lambda b, m: (0, 0)),
                pl.BlockSpec((cout, 1), lambda b, m: (0, 0)),
                pl.BlockSpec((pl.Squeezed(), cout, tm), lambda b, m: (b, 0, m)),
            ],
            out_specs=pl.BlockSpec((pl.Squeezed(), 2, cout, tm),
                                   lambda b, m: (b, 0, 0, m)),
        ),
        compiler_params=_compiler_params(),
    )(px, wt, part, bias, alpha, y1)


# ----------------------------------------------------------------------------- glue
def _im2col(a_nchw, mp):
    """(N, C, H, W) -> (N, 9*C, mp) bf16 patches; columns ordered (tap, channel)."""
    n, c, h, w = a_nchw.shape
    ap = jnp.pad(a_nchw, ((0, 0), (0, 0), (1, 1), (1, 1)))
    cols = [ap[:, :, dy:dy + h, dx:dx + w] for dy in range(3) for dx in range(3)]
    p = jnp.concatenate(cols, axis=1).reshape(n, 9 * c, h * w)
    if mp > h * w:
        p = jnp.pad(p, ((0, 0), (0, 0), (0, mp - h * w)))
    return p.astype(jnp.bfloat16)


def _fold_bn(conv_b, gamma, beta, mean, var, eps):
    s = gamma / jnp.sqrt(var + eps)          # (Cout,)
    b = (conv_b - mean) * s + beta           # (Cout,)
    return s, b


def _wmat(w_oihw, scale):
    """(Cout, Cin, 3, 3) -> (Cout, 9*Cin) bf16, columns ordered (dy, dx, cin),
    with the BN scale folded in (scale commutes with the matmul)."""
    cout, cin = w_oihw.shape[0], w_oihw.shape[1]
    m = jnp.transpose(w_oihw, (0, 2, 3, 1)).reshape(cout, 9 * cin)
    return (m * scale[:, None]).astype(jnp.bfloat16)


def init_params(key, input_nc):
    """Deterministic synthetic parameters with the shapes implied by __init__."""
    in1 = (2 if input_nc == 1 else input_nc) // 2
    ks = jax.random.split(key, 12)
    p = {}
    # fusion_1: Conv2d(in1 -> 30), BN(30), PReLU (single slope, init 0.25)
    p["w1"] = 0.1 * jax.random.normal(ks[0], (30, in1, 3, 3), jnp.float32)
    p["b1"] = 0.1 * jax.random.normal(ks[1], (30,), jnp.float32)
    p["g1"] = 1.0 + 0.1 * jax.random.normal(ks[2], (30,), jnp.float32)
    p["be1"] = 0.1 * jax.random.normal(ks[3], (30,), jnp.float32)
    p["m1"] = 0.1 * jax.random.normal(ks[4], (30,), jnp.float32)
    p["v1"] = 0.5 + jnp.abs(jax.random.normal(ks[5], (30,), jnp.float32))
    p["a1"] = jnp.float32(0.25)
    # fusion_2: Conv2d(60 -> 30), BN(30), PReLU
    p["w2"] = 0.1 * jax.random.normal(ks[6], (30, 60, 3, 3), jnp.float32)
    p["b2"] = 0.1 * jax.random.normal(ks[7], (30,), jnp.float32)
    p["g2"] = 1.0 + 0.1 * jax.random.normal(ks[8], (30,), jnp.float32)
    p["be2"] = 0.1 * jax.random.normal(ks[9], (30,), jnp.float32)
    p["m2"] = 0.1 * jax.random.normal(ks[10], (30,), jnp.float32)
    p["v2"] = 0.5 + jnp.abs(jax.random.normal(ks[11], (30,), jnp.float32))
    p["a2"] = jnp.float32(0.25)
    return p


def multi_source_info_fusion_2(x_nchw, y_nchw, params, eps=1e-5):
    """Forward pass matching the PyTorch module. Inputs/outputs are NCHW."""
    p = params
    n, _, h, w = x_nchw.shape
    m = h * w
    mp = _round_up(m, 128)
    tm = _pick_tm(mp)

    # --- fold BatchNorm (running-stats / eval semantics) into weights + bias ---
    s1, b1 = _fold_bn(p["b1"], p["g1"], p["be1"], p["m1"], p["v1"], eps)
    w1m = _wmat(p["w1"], s1)
    b1r = b1.astype(jnp.float32).reshape(-1, 1)
    a1r = jnp.full((w1m.shape[0], 1), p["a1"], jnp.float32)

    s2, b2 = _fold_bn(p["b2"], p["g2"], p["be2"], p["m2"], p["v2"], eps)
    half = p["w2"].shape[1] // 2
    wt = _wmat(p["w2"][:, :half], s2)   # acts on the x-half of cat(., y1)
    wb = _wmat(p["w2"][:, half:], s2)   # acts on the shared y1-half
    b2r = b2.astype(jnp.float32).reshape(-1, 1)
    a2r = jnp.full((wt.shape[0], 1), p["a2"], jnp.float32)

    def to_spatial(t_flat, c):
        return t_flat[:, :, :m].reshape(n, c, h, w)

    # --- fusion_1 on x and y in a single launch (stacked along batch) ---------
    xy = jnp.concatenate([x_nchw, y_nchw], axis=0)          # (2N, Cin, H, W)
    pxy = _im2col(xy, mp)                                   # (2N, 9*Cin, Mp) bf16
    f1 = _fusion1_call(pxy, w1m, b1r, a1r, tm)              # (2N, 30, Mp) f32
    x1_flat, y1_flat = f1[:n], f1[n:]

    # --- fusion_2 #1: split-K instead of cat(x1, y1); emit reusable y1 partial -
    px1 = _im2col(to_spatial(x1_flat, 30), mp)
    py1 = _im2col(to_spatial(y1_flat, 30), mp)
    x2_flat, part_y = _fusion2_first_call(px1, py1, wt, wb, b2r, a2r, tm)

    # --- fusion_2 #2: reuse y1 partial; fused final cat(x3, y1) ---------------
    px2 = _im2col(to_spatial(x2_flat, 30), mp)
    out4 = _fusion2_second_call(px2, wt, part_y, b2r, a2r, y1_flat, tm)

    # (N, 2, 30, Mp) channel-major -> NCHW (N, 60, H, W): free reshape.
    return out4[:, :, :, :m].reshape(n, 60, h, w)


if __name__ == "__main__":
    input_nc, count = 4, 3          # count is unused by forward (as in the reference)
    N, H, W = 2, 16, 16
    cin = (2 if input_nc == 1 else input_nc) // 2

    key = jax.random.PRNGKey(0)
    kp, kx, ky = jax.random.split(key, 3)
    params = init_params(kp, input_nc)
    x = jax.random.normal(kx, (N, cin, H, W), jnp.float32)
    y = jax.random.normal(ky, (N, cin, H, W), jnp.float32)

    fwd = jax.jit(lambda a, b: multi_source_info_fusion_2(a, b, params))
    out = fwd(x, y)
    jax.block_until_ready(out)
    assert out.shape == (N, 60, H, W), out.shape
    print("KERNEL_OK")
</pallas_src>

<mosaic_0001>
module attributes {stable_mosaic.version = 11 : i64} {
  func.func @_fusion1_kernel(%arg0: i32, %arg1: i32, %arg2: memref<1x18x256xbf16, #tpu.memory_space<vmem>>, %arg3: memref<30x18xbf16, #tpu.memory_space<vmem>>, %arg4: memref<30x1xf32, #tpu.memory_space<vmem>>, %arg5: memref<30x1xf32, #tpu.memory_space<vmem>>, %arg6: memref<1x30x256xf32, #tpu.memory_space<vmem>>) attributes {dimension_semantics = [#tpu.dimension_semantics<parallel>, #tpu.dimension_semantics<parallel>], iteration_bounds = array<i64: 4, 1>, scalar_prefetch = 0 : i64, scratch_operands = 0 : i64, tpu.core_type = #tpu.core_type<tc>, window_params = [{transform_indices = @transform_0, window_bounds = array<i64: 1, 18, 256>}, {pipeline_mode = #tpu.pipeline_mode<synchronous>, transform_indices = @transform_1, window_bounds = array<i64: 30, 18>}, {pipeline_mode = #tpu.pipeline_mode<synchronous>, transform_indices = @transform_2, window_bounds = array<i64: 30, 1>}, {pipeline_mode = #tpu.pipeline_mode<synchronous>, transform_indices = @transform_3, window_bounds = array<i64: 30, 1>}, {transform_indices = @transform_4, window_bounds = array<i64: 1, 30, 256>}]} {
    %c0 = arith.constant 0 : index
    %c0_0 = arith.constant 0 : index
    %0 = vector.load %arg3[%c0, %c0_0] : memref<30x18xbf16, #tpu.memory_space<vmem>>, vector<30x18xbf16>
    %c0_1 = arith.constant 0 : index
    %c0_2 = arith.constant 0 : index
    %c0_3 = arith.constant 0 : index
    %1 = vector.load %arg2[%c0_1, %c0_2, %c0_3] : memref<1x18x256xbf16, #tpu.memory_space<vmem>>, vector<1x18x256xbf16>
    %2 = vector.shape_cast %1 : vector<1x18x256xbf16> to vector<18x256xbf16>
    %cst = arith.constant dense<0.000000e+00> : vector<30x256xf32>
    %3 = tpu.matmul %0, %2, %cst {dimension_numbers = #tpu.dot_dimension_numbers<[1], [0], [0], [1], [0, 0, 1, 1], [], []>} : vector<30x18xbf16>, vector<18x256xbf16>, vector<30x256xf32> -> vector<30x256xf32>
    %c0_4 = arith.constant 0 : index
    %c0_5 = arith.constant 0 : index
    %4 = vector.load %arg4[%c0_4, %c0_5] : memref<30x1xf32, #tpu.memory_space<vmem>>, vector<30x1xf32>
    %5 = vector.broadcast %4 : vector<30x1xf32> to vector<30x256xf32>
    %6 = arith.addf %3, %5 : vector<30x256xf32>
    %cst_6 = arith.constant 0.000000e+00 : f32
    %7 = vector.broadcast %cst_6 : f32 to vector<30x256xf32>
    %8 = arith.cmpf oge, %6, %7 : vector<30x256xf32>
    %c0_7 = arith.constant 0 : index
    %c0_8 = arith.constant 0 : index
    %9 = vector.load %arg5[%c0_7, %c0_8] : memref<30x1xf32, #tpu.memory_space<vmem>>, vector<30x1xf32>
    %10 = vector.broadcast %9 : vector<30x1xf32> to vector<30x256xf32>
    %11 = arith.mulf %10, %6 : vector<30x256xf32>
    %12 = arith.select %8, %6, %11 : vector<30x256xi1>, vector<30x256xf32>
    %c0_9 = arith.constant 0 : index
    %c0_10 = arith.constant 0 : index
    %c0_11 = arith.constant 0 : index
    %13 = vector.load %arg6[%c0_9, %c0_10, %c0_11] : memref<1x30x256xf32, #tpu.memory_space<vmem>>, vector<1x30x256xf32>
    %14 = vector.shape_cast %13 : vector<1x30x256xf32> to vector<30x256xf32>
    %15 = vector.shape_cast %12 : vector<30x256xf32> to vector<1x30x256xf32>
    tpu.vector_store %arg6[%c0_9, %c0_10, %c0_11], %15 {strides = array<i32>} : memref<1x30x256xf32, #tpu.memory_space<vmem>>, vector<1x30x256xf32>,
    return
  }
  func.func @transform_0(%arg0: i32, %arg1: i32) -> (i32, i32, i32) {
    %c0_i32 = arith.constant 0 : i32
    %c0_i32_0 = arith.constant 0 : i32
    return %arg0, %c0_i32, %arg1 : i32, i32, i32
  }
  func.func @transform_1(%arg0: i32, %arg1: i32) -> (i32, i32) {
    %c0_i32 = arith.constant 0 : i32
    %c0_i32_0 = arith.constant 0 : i32
    %c0_i32_1 = arith.constant 0 : i32
    return %c0_i32, %c0_i32_0 : i32, i32
  }
  func.func @transform_2(%arg0: i32, %arg1: i32) -> (i32, i32) {
    %c0_i32 = arith.constant 0 : i32
    %c0_i32_0 = arith.constant 0 : i32
    %c0_i32_1 = arith.constant 0 : i32
    return %c0_i32, %c0_i32_0 : i32, i32
  }
  func.func @transform_3(%arg0: i32, %arg1: i32) -> (i32, i32) {
    %c0_i32 = arith.constant 0 : i32
    %c0_i32_0 = arith.constant 0 : i32
    %c0_i32_1 = arith.constant 0 : i32
    return %c0_i32, %c0_i32_0 : i32, i32
  }
  func.func @transform_4(%arg0: i32, %arg1: i32) -> (i32, i32, i32) {
    %c0_i32 = arith.constant 0 : i32
    %c0_i32_0 = arith.constant 0 : i32
    return %arg0, %c0_i32, %arg1 : i32, i32, i32
  }
}

module attributes {stable_mosaic.version = 11 : i64} {
  func.func @_fusion2_first_kernel(%arg0: i32, %arg1: i32, %arg2: memref<1x270x256xbf16, #tpu.memory_space<vmem>>, %arg3: memref<1x270x256xbf16, #tpu.memory_space<vmem>>, %arg4: memref<30x270xbf16, #tpu.memory_space<vmem>>, %arg5: memref<30x270xbf16, #tpu.memory_space<vmem>>, %arg6: memref<30x1xf32, #tpu.memory_space<vmem>>, %arg7: memref<30x1xf32, #tpu.memory_space<vmem>>, %arg8: memref<1x30x256xf32, #tpu.memory_space<vmem>>, %arg9: memref<1x30x256xf32, #tpu.memory_space<vmem>>) attributes {dimension_semantics = [#tpu.dimension_semantics<parallel>, #tpu.dimension_semantics<parallel>], iteration_bounds = array<i64: 2, 1>, scalar_prefetch = 0 : i64, scratch_operands = 0 : i64, tpu.core_type = #tpu.core_type<tc>, window_params = [{transform_indices = @transform_0, window_bounds = array<i64: 1, 270, 256>}, {transform_indices = @transform_1, window_bounds = array<i64: 1, 270, 256>}, {pipeline_mode = #tpu.pipeline_mode<synchronous>, transform_indices = @transform_2, window_bounds = array<i64: 30, 270>}, {pipeline_mode = #tpu.pipeline_mode<synchronous>, transform_indices = @transform_3, window_bounds = array<i64: 30, 270>}, {pipeline_mode = #tpu.pipeline_mode<synchronous>, transform_indices = @transform_4, window_bounds = array<i64: 30, 1>}, {pipeline_mode = #tpu.pipeline_mode<synchronous>, transform_indices = @transform_5, window_bounds = array<i64: 30, 1>}, {transform_indices = @transform_6, window_bounds = array<i64: 1, 30, 256>}, {transform_indices = @transform_7, window_bounds = array<i64: 1, 30, 256>}]} {
    %c0 = arith.constant 0 : index
    %c0_0 = arith.constant 0 : index
    %0 = vector.load %arg5[%c0, %c0_0] : memref<30x270xbf16, #tpu.memory_space<vmem>>, vector<30x270xbf16>
    %c0_1 = arith.constant 0 : index
    %c0_2 = arith.constant 0 : index
    %c0_3 = arith.constant 0 : index
    %1 = vector.load %arg3[%c0_1, %c0_2, %c0_3] : memref<1x270x256xbf16, #tpu.memory_space<vmem>>, vector<1x270x256xbf16>
    %2 = vector.shape_cast %1 : vector<1x270x256xbf16> to vector<270x256xbf16>
    %cst = arith.constant dense<0.000000e+00> : vector<30x256xf32>
    %3 = tpu.matmul %0, %2, %cst {dimension_numbers = #tpu.dot_dimension_numbers<[1], [0], [0], [1], [0, 0, 1, 1], [], []>} : vector<30x270xbf16>, vector<270x256xbf16>, vector<30x256xf32> -> vector<30x256xf32>
    %c0_4 = arith.constant 0 : index
    %c0_5 = arith.constant 0 : index
    %4 = vector.load %arg4[%c0_4, %c0_5] : memref<30x270xbf16, #tpu.memory_space<vmem>>, vector<30x270xbf16>
    %c0_6 = arith.constant 0 : index
    %c0_7 = arith.constant 0 : index
    %c0_8 = arith.constant 0 : index
    %5 = vector.load %arg2[%c0_6, %c0_7, %c0_8] : memref<1x270x256xbf16, #tpu.memory_space<vmem>>, vector<1x270x256xbf16>
    %6 = vector.shape_cast %5 : vector<1x270x256xbf16> to vector<270x256xbf16>
    %cst_9 = arith.constant dense<0.000000e+00> : vector<30x256xf32>
    %7 = tpu.matmul %4, %6, %cst_9 {dimension_numbers = #tpu.dot_dimension_numbers<[1], [0], [0], [1], [0, 0, 1, 1], [], []>} : vector<30x270xbf16>, vector<270x256xbf16>, vector<30x256xf32> -> vector<30x256xf32>
    %8 = arith.addf %7, %3 : vector<30x256xf32>
    %c0_10 = arith.constant 0 : index
    %c0_11 = arith.constant 0 : index
    %9 = vector.load %arg6[%c0_10, %c0_11] : memref<30x1xf32, #tpu.memory_space<vmem>>, vector<30x1xf32>
    %10 = vector.broadcast %9 : vector<30x1xf32> to vector<30x256xf32>
    %11 = arith.addf %8, %10 : vector<30x256xf32>
    %cst_12 = arith.constant 0.000000e+00 : f32
    %12 = vector.broadcast %cst_12 : f32 to vector<30x256xf32>
    %13 = arith.cmpf oge, %11, %12 : vector<30x256xf32>
    %c0_13 = arith.constant 0 : index
    %c0_14 = arith.constant 0 : index
    %14 = vector.load %arg7[%c0_13, %c0_14] : memref<30x1xf32, #tpu.memory_space<vmem>>, vector<30x1xf32>
    %15 = vector.broadcast %14 : vector<30x1xf32> to vector<30x256xf32>
    %16 = arith.mulf %15, %11 : vector<30x256xf32>
    %17 = arith.select %13, %11, %16 : vector<30x256xi1>, vector<30x256xf32>
    %c0_15 = arith.constant 0 : index
    %c0_16 = arith.constant 0 : index
    %c0_17 = arith.constant 0 : index
    %18 = vector.load %arg8[%c0_15, %c0_16, %c0_17] : memref<1x30x256xf32, #tpu.memory_space<vmem>>, vector<1x30x256xf32>
    %19 = vector.shape_cast %18 : vector<1x30x256xf32> to vector<30x256xf32>
    %20 = vector.shape_cast %17 : vector<30x256xf32> to vector<1x30x256xf32>
    tpu.vector_store %arg8[%c0_15, %c0_16, %c0_17], %20 {strides = array<i32>} : memref<1x30x256xf32, #tpu.memory_space<vmem>>, vector<1x30x256xf32>,
    %c0_18 = arith.constant 0 : index
    %c0_19 = arith.constant 0 : index
    %c0_20 = arith.constant 0 : index
    %21 = vector.load %arg9[%c0_18, %c0_19, %c0_20] : memref<1x30x256xf32, #tpu.memory_space<vmem>>, vector<1x30x256xf32>
    %22 = vector.shape_cast %21 : vector<1x30x256xf32> to vector<30x256xf32>
    %23 = vector.shape_cast %3 : vector<30x256xf32> to vector<1x30x256xf32>
    tpu.vector_store %arg9[%c0_18, %c0_19, %c0_20], %23 {strides = array<i32>} : memref<1x30x256xf32, #tpu.memory_space<vmem>>, vector<1x30x256xf32>,
    return
  }
  func.func @transform_0(%arg0: i32, %arg1: i32) -> (i32, i32, i32) {
    %c0_i32 = arith.constant 0 : i32
    %c0_i32_0 = arith.constant 0 : i32
    return %arg0, %c0_i32, %arg1 : i32, i32, i32
  }
  func.func @transform_1(%arg0: i32, %arg1: i32) -> (i32, i32, i32) {
    %c0_i32 = arith.constant 0 : i32
    %c0_i32_0 = arith.constant 0 : i32
    return %arg0, %c0_i32, %arg1 : i32, i32, i32
  }
  func.func @transform_2(%arg0: i32, %arg1: i32) -> (i32, i32) {
    %c0_i32 = arith.constant 0 : i32
    %c0_i32_0 = arith.constant 0 : i32
    %c0_i32_1 = arith.constant 0 : i32
    return %c0_i32, %c0_i32_0 : i32, i32
  }
  func.func @transform_3(%arg0: i32, %arg1: i32) -> (i32, i32) {
    %c0_i32 = arith.constant 0 : i32
    %c0_i32_0 = arith.constant 0 : i32
    %c0_i32_1 = arith.constant 0 : i32
    return %c0_i32, %c0_i32_0 : i32, i32
  }
  func.func @transform_4(%arg0: i32, %arg1: i32) -> (i32, i32) {
    %c0_i32 = arith.constant 0 : i32
    %c0_i32_0 = arith.constant 0 : i32
    %c0_i32_1 = arith.constant 0 : i32
    return %c0_i32, %c0_i32_0 : i32, i32
  }
  func.func @transform_5(%arg0: i32, %arg1: i32) -> (i32, i32) {
    %c0_i32 = arith.constant 0 : i32
    %c0_i32_0 = arith.constant 0 : i32
    %c0_i32_1 = arith.constant 0 : i32
    return %c0_i32, %c0_i32_0 : i32, i32
  }
  func.func @transform_6(%arg0: i32, %arg1: i32) -> (i32, i32, i32) {
    %c0_i32 = arith.constant 0 : i32
    %c0_i32_0 = arith.constant 0 : i32
    return %arg0, %c0_i32, %arg1 : i32, i32, i32
  }
  func.func @transform_7(%arg0: i32, %arg1: i32) -> (i32, i32, i32) {
    %c0_i32 = arith.constant 0 : i32
    %c0_i32_0 = arith.constant 0 : i32
    return %arg0, %c0_i32, %arg1 : i32, i32, i32
  }
}

module attributes {stable_mosaic.version = 11 : i64} {
  func.func @_fusion2_second_kernel(%arg0: i32, %arg1: i32, %arg2: memref<1x270x256xbf16, #tpu.memory_space<vmem>>, %arg3: memref<30x270xbf16, #tpu.memory_space<vmem>>, %arg4: memref<1x30x256xf32, #tpu.memory_space<vmem>>, %arg5: memref<30x1xf32, #tpu.memory_space<vmem>>, %arg6: memref<30x1xf32, #tpu.memory_space<vmem>>, %arg7: memref<1x30x256xf32, #tpu.memory_space<vmem>>, %arg8: memref<1x2x30x256xf32, #tpu.memory_space<vmem>>) attributes {dimension_semantics = [#tpu.dimension_semantics<parallel>, #tpu.dimension_semantics<parallel>], iteration_bounds = array<i64: 2, 1>, scalar_prefetch = 0 : i64, scratch_operands = 0 : i64, tpu.core_type = #tpu.core_type<tc>, window_params = [{transform_indices = @transform_0, window_bounds = array<i64: 1, 270, 256>}, {pipeline_mode = #tpu.pipeline_mode<synchronous>, transform_indices = @transform_1, window_bounds = array<i64: 30, 270>}, {transform_indices = @transform_2, window_bounds = array<i64: 1, 30, 256>}, {pipeline_mode = #tpu.pipeline_mode<synchronous>, transform_indices = @transform_3, window_bounds = array<i64: 30, 1>}, {pipeline_mode = #tpu.pipeline_mode<synchronous>, transform_indices = @transform_4, window_bounds = array<i64: 30, 1>}, {transform_indices = @transform_5, window_bounds = array<i64: 1, 30, 256>}, {transform_indices = @transform_6, window_bounds = array<i64: 1, 2, 30, 256>}]} {
    %c0 = arith.constant 0 : index
    %c0_0 = arith.constant 0 : index
    %0 = vector.load %arg3[%c0, %c0_0] : memref<30x270xbf16, #tpu.memory_space<vmem>>, vector<30x270xbf16>
    %c0_1 = arith.constant 0 : index
    %c0_2 = arith.constant 0 : index
    %c0_3 = arith.constant 0 : index
    %1 = vector.load %arg2[%c0_1, %c0_2, %c0_3] : memref<1x270x256xbf16, #tpu.memory_space<vmem>>, vector<1x270x256xbf16>
    %2 = vector.shape_cast %1 : vector<1x270x256xbf16> to vector<270x256xbf16>
    %cst = arith.constant dense<0.000000e+00> : vector<30x256xf32>
    %3 = tpu.matmul %0, %2, %cst {dimension_numbers = #tpu.dot_dimension_numbers<[1], [0], [0], [1], [0, 0, 1, 1], [], []>} : vector<30x270xbf16>, vector<270x256xbf16>, vector<30x256xf32> -> vector<30x256xf32>
    %c0_4 = arith.constant 0 : index
    %c0_5 = arith.constant 0 : index
    %c0_6 = arith.constant 0 : index
    %4 = vector.load %arg4[%c0_4, %c0_5, %c0_6] : memref<1x30x256xf32, #tpu.memory_space<vmem>>, vector<1x30x256xf32>
    %5 = vector.shape_cast %4 : vector<1x30x256xf32> to vector<30x256xf32>
    %6 = arith.addf %3, %5 : vector<30x256xf32>
    %c0_7 = arith.constant 0 : index
    %c0_8 = arith.constant 0 : index
    %7 = vector.load %arg5[%c0_7, %c0_8] : memref<30x1xf32, #tpu.memory_space<vmem>>, vector<30x1xf32>
    %8 = vector.broadcast %7 : vector<30x1xf32> to vector<30x256xf32>
    %9 = arith.addf %6, %8 : vector<30x256xf32>
    %cst_9 = arith.constant 0.000000e+00 : f32
    %10 = vector.broadcast %cst_9 : f32 to vector<30x256xf32>
    %11 = arith.cmpf oge, %9, %10 : vector<30x256xf32>
    %c0_10 = arith.constant 0 : index
    %c0_11 = arith.constant 0 : index
    %12 = vector.load %arg6[%c0_10, %c0_11] : memref<30x1xf32, #tpu.memory_space<vmem>>, vector<30x1xf32>
    %13 = vector.broadcast %12 : vector<30x1xf32> to vector<30x256xf32>
    %14 = arith.mulf %13, %9 : vector<30x256xf32>
    %15 = arith.select %11, %9, %14 : vector<30x256xi1>, vector<30x256xf32>
    %c0_12 = arith.constant 0 : index
    %c0_13 = arith.constant 0 : index
    %c0_14 = arith.constant 0 : index
    %c0_15 = arith.constant 0 : index
    %16 = vector.load %arg8[%c0_12, %c0_13, %c0_14, %c0_15] : memref<1x2x30x256xf32, #tpu.memory_space<vmem>>, vector<1x1x30x256xf32>
    %17 = vector.shape_cast %16 : vector<1x1x30x256xf32> to vector<30x256xf32>
    %18 = vector.shape_cast %15 : vector<30x256xf32> to vector<1x1x30x256xf32>
    tpu.vector_store %arg8[%c0_12, %c0_13, %c0_14, %c0_15], %18 {strides = array<i32>} : memref<1x2x30x256xf32, #tpu.memory_space<vmem>>, vector<1x1x30x256xf32>,
    %c0_16 = arith.constant 0 : index
    %c0_17 = arith.constant 0 : index
    %c0_18 = arith.constant 0 : index
    %19 = vector.load %arg7[%c0_16, %c0_17, %c0_18] : memref<1x30x256xf32, #tpu.memory_space<vmem>>, vector<1x30x256xf32>
    %20 = vector.shape_cast %19 : vector<1x30x256xf32> to vector<30x256xf32>
    %c0_19 = arith.constant 0 : index
    %c1 = arith.constant 1 : index
    %c0_20 = arith.constant 0 : index
    %c0_21 = arith.constant 0 : index
    %21 = vector.load %arg8[%c0_19, %c1, %c0_20, %c0_21] : memref<1x2x30x256xf32, #tpu.memory_space<vmem>>, vector<1x1x30x256xf32>
    %22 = vector.shape_cast %21 : vector<1x1x30x256xf32> to vector<30x256xf32>
    %23 = vector.shape_cast %20 : vector<30x256xf32> to vector<1x1x30x256xf32>
    tpu.vector_store %arg8[%c0_19, %c1, %c0_20, %c0_21], %23 {strides = array<i32>} : memref<1x2x30x256xf32, #tpu.memory_space<vmem>>, vector<1x1x30x256xf32>,
    return
  }
  func.func @transform_0(%arg0: i32, %arg1: i32) -> (i32, i32, i32) {
    %c0_i32 = arith.constant 0 : i32
    %c0_i32_0 = arith.constant 0 : i32
    return %arg0, %c0_i32, %arg1 : i32, i32, i32
  }
  func.func @transform_1(%arg0: i32, %arg1: i32) -> (i32, i32) {
    %c0_i32 = arith.constant 0 : i32
    %c0_i32_0 = arith.constant 0 : i32
    %c0_i32_1 = arith.constant 0 : i32
    return %c0_i32, %c0_i32_0 : i32, i32
  }
  func.func @transform_2(%arg0: i32, %arg1: i32) -> (i32, i32, i32) {
    %c0_i32 = arith.constant 0 : i32
    %c0_i32_0 = arith.constant 0 : i32
    return %arg0, %c0_i32, %arg1 : i32, i32, i32
  }
  func.func @transform_3(%arg0: i32, %arg1: i32) -> (i32, i32) {
    %c0_i32 = arith.constant 0 : i32
    %c0_i32_0 = arith.constant 0 : i32
    %c0_i32_1 = arith.constant 0 : i32
    return %c0_i32, %c0_i32_0 : i32, i32
  }
  func.func @transform_4(%arg0: i32, %arg1: i32) -> (i32, i32) {
    %c0_i32 = arith.constant 0 : i32
    %c0_i32_0 = arith.constant 0 : i32
    %c0_i32_1 = arith.constant 0 : i32
    return %c0_i32, %c0_i32_0 : i32, i32
  }
  func.func @transform_5(%arg0: i32, %arg1: i32) -> (i32, i32, i32) {
    %c0_i32 = arith.constant 0 : i32
    %c0_i32_0 = arith.constant 0 : i32
    return %arg0, %c0_i32, %arg1 : i32, i32, i32
  }
  func.func @transform_6(%arg0: i32, %arg1: i32) -> (i32, i32, i32, i32) {
    %c0_i32 = arith.constant 0 : i32
    %c0_i32_0 = arith.constant 0 : i32
    %c0_i32_1 = arith.constant 0 : i32
    return %arg0, %c0_i32, %c0_i32_0, %arg1 : i32, i32, i32, i32
  }
}

</mosaic_0001>

<llo_original>
// kernel: _lambda_.3
$region0: #{_lambda_.3}
  #allocation0 [shape = 'u32[]', space=smem, size = 0x4, offset = 0x4, fixed_abs, tag = 'smem constant byte address 0x4 - core index']
  #allocation1 [shape = 'u32[72,128]{1,0:T(1,128)}', space=vmem, size = 0x9000, scoped, tag = 'internal scratch']
  %s0 = inlined_call_operand.vmem [shape: bf16[4,18,256], index: 0, kind: input, shape index: {}]
  %s1 = inlined_call_operand.vmem [shape: bf16[30,18], index: 1, kind: input, shape index: {}]
  %s2 = inlined_call_operand.vmem [shape: f32[30,1], index: 2, kind: input, shape index: {}]
  %s3 = inlined_call_operand.vmem [shape: f32[30,1], index: 3, kind: input, shape index: {}]
  %s4 = inlined_call_operand.vmem [shape: f32[4,30,256], index: 4, kind: output, shape index: {}]
  %s5 = sld [smem:[#allocation0]]
  $region49: #{_lambda_.3} parent=0
    _
  %s7 = ssub.s32 1, %s5
  %s8 = scalar_select 0, %s7, %s5
  loop: start=0, step=1, limit=6
  $region2: #{_lambda_.3} parent=0 // loop_pre_header
    _
  $region3: #{_lambda_.3} parent=0 // loop_header
    %s10 = sphi 0, %s14
    %p11 = scmp.ge.s32.totalorder %s10, 6
    %s17 = sphi 0, %s29
    %s18 = sphi 0, %s25
    %s19 = sphi 0, %s17
    %s20 = sphi 0, %s18
    %s21 = sphi 0, %s19
    %s22 = sphi 0, %s20
    %s34 = sphi 0, %s36
    %s37 = sphi 0, %s34
    %s38 = sphi 0, %s37
    %s54 = sphi 0, %s38
    %s58 = sphi 0, %s58
    %s60 = sphi 0, %s58
    %s61 = sphi 0, %s60
    %s75 = sphi 0, %s61
    %s79 = sphi 0, %s79
    %s81 = sphi 0, %s79
    %s82 = sphi 0, %s81
    %s96 = sphi 0, %s82
    %s100 = sphi 0, %s100
    %s102 = sphi 0, %s100
    %s103 = sphi 0, %s102
    %s117 = sphi 0, %s103
    %s125 = sphi 0, %s127
    %s128 = sphi 0, %s125
    %s129 = sphi 0, %s128
    %s145 = sphi 0, %s129
  $region4: #{_lambda_.3} parent=0 // loop_header_branch
    %13 = sbr.rel (%p11) target = $region8
  $region5: #{_lambda_.3} parent=0 // loop_body
    %s15 = ssub.s32 %s10, 1
    %s16 = ssub.s32 %s10, 2
    %s23 = sadd.s32 1, %s18
    %p24 = scmp.ge.s32.totalorder %s23, 1
    %s25 = scalar_select %p24, 0, %s23
    %s26 = sadd.s32 1, %s17
    %s27 = scalar_select %p24, %s26, %s17
    %p28 = scmp.ge.s32.totalorder %s27, 4
    %s29 = scalar_select %p28, 0, %s27
    %s30 = ssub.s32 %s17, %s29
    %s31 = ssub.s32 %s18, %s25
    %s32 = sor.u32 %s30, %s31
    %p33 = scmp.eq.s32.totalorder %s32, 0
    %s35 = sadd.s32 %s34, 1
    %s36 = scalar_select %p33, %s34, %s35
    %p39 = pneg %p33
    %p40 = scmp.eq.s32.totalorder %s10, 3
    %p41 = por %p39, %p40
    %p42 = scmp.ne.s32.totalorder %s34, %s37
    %p43 = scmp.eq.s32.totalorder %s10, 0
    %p44 = por %p42, %p43
    %p45 = scmp.ne.s32.totalorder %s34, %s37
    %p46 = scmp.eq.s32.totalorder %s15, 3
    %p47 = por %p45, %p46
    %p48 = scmp.ne.s32.totalorder %s37, %s38
    %p49 = scmp.eq.s32.totalorder %s15, 0
    %p50 = por %p48, %p49
    %p51 = scmp.ne.s32.totalorder %s37, %s38
    %p52 = scmp.eq.s32.totalorder %s16, 3
    %p53 = por %p51, %p52
    %p55 = scmp.ne.s32.totalorder %s38, %s54
    %p56 = scmp.eq.s32.totalorder %s16, 0
    %p57 = por %p55, %p56
    %s59 = sadd.s32 %s58, 1
    %p62 = scmp.eq.s32.totalorder %s10, 3
    %p63 = scmp.ne.s32.totalorder %s58, %s60
    %p64 = scmp.eq.s32.totalorder %s10, 0
    %p65 = por %p63, %p64
    %p66 = scmp.ne.s32.totalorder %s58, %s60
    %p67 = scmp.eq.s32.totalorder %s15, 3
    %p68 = por %p66, %p67
    %p69 = scmp.ne.s32.totalorder %s60, %s61
    %p70 = scmp.eq.s32.totalorder %s15, 0
    %p71 = por %p69, %p70
    %p72 = scmp.ne.s32.totalorder %s60, %s61
    %p73 = scmp.eq.s32.totalorder %s16, 3
    %p74 = por %p72, %p73
    %p76 = scmp.ne.s32.totalorder %s61, %s75
    %p77 = scmp.eq.s32.totalorder %s16, 0
    %p78 = por %p76, %p77
    %s80 = sadd.s32 %s79, 1
    %p83 = scmp.eq.s32.totalorder %s10, 3
    %p84 = scmp.ne.s32.totalorder %s79, %s81
    %p85 = scmp.eq.s32.totalorder %s10, 0
    %p86 = por %p84, %p85
    %p87 = scmp.ne.s32.totalorder %s79, %s81
    %p88 = scmp.eq.s32.totalorder %s15, 3
    %p89 = por %p87, %p88
    %p90 = scmp.ne.s32.totalorder %s81, %s82
    %p91 = scmp.eq.s32.totalorder %s15, 0
    %p92 = por %p90, %p91
    %p93 = scmp.ne.s32.totalorder %s81, %s82
    %p94 = scmp.eq.s32.totalorder %s16, 3
    %p95 = por %p93, %p94
    %p97 = scmp.ne.s32.totalorder %s82, %s96
    %p98 = scmp.eq.s32.totalorder %s16, 0
    %p99 = por %p97, %p98
    %s101 = sadd.s32 %s100, 1
    %p104 = scmp.eq.s32.totalorder %s10, 3
    %p105 = scmp.ne.s32.totalorder %s100, %s102
    %p106 = scmp.eq.s32.totalorder %s10, 0
    %p107 = por %p105, %p106
    %p108 = scmp.ne.s32.totalorder %s100, %s102
    %p109 = scmp.eq.s32.totalorder %s15, 3
    %p110 = por %p108, %p109
    %p111 = scmp.ne.s32.totalorder %s102, %s103
    %p112 = scmp.eq.s32.totalorder %s15, 0
    %p113 = por %p111, %p112
    %p114 = scmp.ne.s32.totalorder %s102, %s103
    %p115 = scmp.eq.s32.totalorder %s16, 3
    %p116 = por %p114, %p115
    %p118 = scmp.ne.s32.totalorder %s103, %s117
    %p119 = scmp.eq.s32.totalorder %s16, 0
    %p120 = por %p118, %p119
    %s121 = ssub.s32 %s17, %s29
    %s122 = ssub.s32 %s18, %s25
    %s123 = sor.u32 %s121, %s122
    %p124 = scmp.eq.s32.totalorder %s123, 0
    %s126 = sadd.s32 %s125, 1
    %s127 = scalar_select %p124, %s125, %s126
    %p130 = pneg %p124
    %p131 = scmp.eq.s32.totalorder %s10, 3
    %p132 = por %p130, %p131
    %p133 = scmp.ne.s32.totalorder %s125, %s128
    %p134 = scmp.eq.s32.totalorder %s10, 0
    %p135 = por %p133, %p134
    %p136 = scmp.ne.s32.totalorder %s125, %s128
    %p137 = scmp.eq.s32.totalorder %s15, 3
    %p138 = por %p136, %p137
    %p139 = scmp.ne.s32.totalorder %s128, %s129
    %p140 = scmp.eq.s32.totalorder %s15, 0
    %p141 = por %p139, %p140
    %p142 = scmp.ne.s32.totalorder %s128, %s129
    %p143 = scmp.eq.s32.totalorder %s16, 3
    %p144 = por %p142, %p143
    %p146 = scmp.ne.s32.totalorder %s129, %s145
    %p147 = scmp.eq.s32.totalorder %s16, 0
    %p148 = por %p146, %p147
    %p149 = scmp.le.s32.totalorder 1, %s10
    %p150 = scmp.lt.s32.totalorder %s10, 5
    %p151 = pnand %p149, %p150
    %p152 = pneg %p151
    // Predicated region
    $region9: #{_lambda_.3} parent=5 // pred_check
      _
    $region10: #{_lambda_.3} parent=5 // pred_check_branch
      %154 = sbr.rel (%p151) target = $region12
    $region11: #{_lambda_.3} parent=5 // pred_region
      %s155 = ssub.s32 %s10, 1
      // Predicated region
      $region13: #{_lambda_.3} parent=11 // pred_check
        %p156 = pneg %p71
      $region14: #{_lambda_.3} parent=11 // pred_check_branch
        %158 = sbr.rel (%p156) target = $region16
      $region15: #{_lambda_.3} parent=11 // pred_region
        _
      $region16: #{_lambda_.3} parent=11 // pred_fallthru
        _
      // Predicated region
      $region17: #{_lambda_.3} parent=11 // pred_check
        %p159 = pneg %p92
      $region18: #{_lambda_.3} parent=11 // pred_check_branch
        %161 = sbr.rel (%p159) target = $region20
      $region19: #{_lambda_.3} parent=11 // pred_region
        _
      $region20: #{_lambda_.3} parent=11 // pred_fallthru
        _
      // Predicated region
      $region21: #{_lambda_.3} parent=11 // pred_check
        %p162 = pneg %p113
      $region22: #{_lambda_.3} parent=11 // pred_check_branch
        %164 = sbr.rel (%p162) target = $region24
      $region23: #{_lambda_.3} parent=11 // pred_region
        _
      $region24: #{_lambda_.3} parent=11 // pred_fallthru
        _
    $region12: #{_lambda_.3} parent=5 // pred_fallthru
      _
    %p165 = scmp.lt.s32.totalorder %s10, 4
    // Predicated region
    $region25: #{_lambda_.3} parent=5 // pred_check
      %p166 = pneg %p165
    $region26: #{_lambda_.3} parent=5 // pred_check_branch
      %168 = sbr.rel (%p166) target = $region28
    $region27: #{_lambda_.3} parent=5 // pred_region
      // Predicated region
      $region29: #{_lambda_.3} parent=27 // pred_check
        %p169 = pneg %p44
      $region30: #{_lambda_.3} parent=27 // pred_check_branch
        %171 = sbr.rel (%p169) target = $region32
      $region31: #{_lambda_.3} parent=27 // pred_region
        %s172 = smul.u32 2, %s18
        %p173 = scmp.lt.s32.totalorder %s17, 3
        %s174 = scalar_select %p173, %s17, 3
        %p175 = scmp.lt.s32.totalorder %s172, 1
        %s176 = scalar_select %p175, %s172, 1
        %s177 = smul.addr %s174, 6
        %s178 = sadd.s32 %s176, %s177
        %s179 = smul.addr %s178, 4
        %s180 = scalar_lea.vmem %s0, %s179
        %s181 = smul.u32 2, %s18
      $region32: #{_lambda_.3} parent=27 // pred_fallthru
        _
    $region28: #{_lambda_.3} parent=5 // pred_fallthru
      _
    %p182 = scmp.le.s32.totalorder 1, %s10
    %p183 = scmp.lt.s32.totalorder %s10, 5
    %p184 = pnand %p182, %p183
    %p185 = pneg %p184
    // Predicated region
    $region33: #{_lambda_.3} parent=5 // pred_check
      _
    $region34: #{_lambda_.3} parent=5 // pred_check_branch
      %187 = sbr.rel (%p184) target = $region36
    $region35: #{_lambda_.3} parent=5 // pred_region
      %s188 = ssub.s32 %s10, 1
      %s189 = smul.u32 2, %s20
      %p190 = scmp.lt.s32.totalorder %s19, 3
      %s191 = scalar_select %p190, %s19, 3
      %p192 = scmp.lt.s32.totalorder %s189, 1
      %s193 = scalar_select %p192, %s189, 1
      %s194 = smul.addr %s191, 6
      %s195 = sadd.s32 %s193, %s194
      %s196 = smul.addr %s195, 4
      %s197 = scalar_lea.vmem %s0, %s196
      %p198 = pneg %p50
      %p199 = pneg %p47
      %p200 = pneg %p71
      %p201 = pneg %p68
      %p202 = pneg %p92
      %p203 = pneg %p89
      %p204 = pneg %p113
      %p205 = pneg %p110
      %p206 = pneg %p141
      %p207 = pneg %p138
      %s208 = smul.u32 2, %s20
      %p209 = scmp.lt.s32.totalorder %s19, 3
      %s210 = scalar_select %p209, %s19, 3
      %p211 = scmp.lt.s32.totalorder %s208, 1
      %s212 = scalar_select %p211, %s208, 1
      %s213 = smul.addr %s210, 8
      %s214 = sadd.s32 %s212, %s213
      %s215 = smul.addr %s214, 8
      %s216 = scalar_lea.vmem %s4, %s215
      %s217 = smul.u32 2, %s20
      %p218 = scmp.lt.s32.totalorder %s19, 3
      %s219 = scalar_select %p218, %s19, 3
      %p220 = scmp.lt.s32.totalorder %s217, 1
      %s221 = scalar_select %p220, %s217, 1
      %s222 = smul.addr %s219, 6
      %s223 = sadd.s32 %s221, %s222
      %s224 = smul.addr %s223, 4
      %s225 = scalar_lea.vmem %s0, %s224
      %s226 = smul.u32 2, %s20
      %s227 = smul.u32 2, %s20
      %p228 = scmp.lt.s32.totalorder %s19, 3
      %s229 = scalar_select %p228, %s19, 3
      %p230 = scmp.lt.s32.totalorder %s227, 1
      %s231 = scalar_select %p230, %s227, 1
      %s232 = smul.addr %s229, 8
      %s233 = sadd.s32 %s231, %s232
      %s234 = smul.addr %s233, 8
      %s235 = scalar_lea.vmem %s4, %s234
      %s236 = smul.u32 2, %s20
      %v238 = vld [vmem:[%s1] sm:$0xf]
      %v239 = vld [vmem:[%s1 + $0x4] sm:$0xf]
      %v240 = vld [vmem:[%s1 + $0x8] sm:$0xf]
      %v241 = vld [vmem:[%s1 + $0xc] sm:$0x7]
      %v242 = vld [vmem:[%s225] sm:$0xff]
      %v243 = vld [vmem:[%s225 + $0x8] sm:$0xff]
      %v244 = vld [vmem:[%s225 + $0x10] sm:$0x11]
      %v245 = vld [vmem:[%s2] sm:$0xff]
      %v246 = vld [vmem:[%s2 + $0x8] sm:$0xff]
      %v247 = vld [vmem:[%s2 + $0x10] sm:$0xff]
      %v248 = vld [vmem:[%s2 + $0x18] sm:$0x3f]
      %250 = vset.pattern.permute.xlu0 0
      %251 = vperm.xlu0 %250, %v245
      %v252 = vpop.permute.xlu0 %251
      %255 = vset.pattern.permute.xlu0 0
      %256 = vperm.xlu0 %255, %v246
      %v257 = vpop.permute.xlu0 %256
      %260 = vset.pattern.permute.xlu0 0
      %261 = vperm.xlu0 %260, %v247
      %v262 = vpop.permute.xlu0 %261
      %265 = vset.pattern.permute.xlu0 0
      %266 = vperm.xlu0 %265, %v248
      %v267 = vpop.permute.xlu0 %266
      %v273 = vunpack.c.l.b16 %v238
      %v274 = vunpack.c.l.b16 %v239
      %v275 = vunpack.c.l.b16 %v240
      %v276 = vunpack.c.l.b16 %v241
      %v277 = vpack.c.b16 %v274, %v273
      %v278 = vpack.c.b16 %v276, %v275
      %v282 = vunpack.c.l.b16 %v242
      %v283 = vunpack.c.h.b16 %v242
      %v284 = vunpack.c.l.b16 %v243
      %v285 = vunpack.c.h.b16 %v243
      %v286 = vunpack.c.l.b16 %v244
      %v287 = vunpack.c.h.b16 %v244
      %v288 = vpack.c.b16 %v284, %v282
      %v289 = vpack.c.b16 %v285, %v283
      %v290 = vpack.c.b16 %v286, %v286
      %v291 = vpack.c.b16 %v287, %v287
      %vm294 = vcmask 146432
      %v296 = vsel %vm294, %v277, 0
      %v299 = vsel %vm294, %v278, 0
      %vm301 = vcmask 1040384
      %v303 = vsel %vm301, %v290, 0
      %v306 = vsel %vm301, %v291, 0
      %308 = vmatpush.bf16.msra.mxu0 0
      %309 = vmatpush.bf16.msra.mxu0 0
      %310 = vmatpush.bf16.msra.mxu0 0
      %311 = vmatpush.bf16.msra.mxu0 0
      %312 = vmatpush.bf16.msra.mxu0 0
      %313 = vmatpush.bf16.msra.mxu0 0
      %314 = vmatpush.bf16.msra.mxu0 %v303
      %315 = vmatpush.bf16.msra.mxu0 %v288
      %316 = vmatmul.bf16.gmra.mxu0 %v296
      %v317 = vpop.f32.mrf.mxu0
      %v318 = vadd.f32 %v252, %v317
      %v319 = vpop.f32.mrf.mxu0
      %v320 = vadd.f32 %v257, %v319
      %321 = vmatmul.bf16.gmra.mxu0 %v299
      %v322 = vpop.f32.mrf.mxu0
      %v323 = vadd.f32 %v262, %v322
      %v324 = vpop.f32.mrf.mxu0
      %v325 = vadd.f32 %v267, %v324
      %326 = vdwg.mxu0
      %327 = vmatpush.bf16.msra.mxu0 0
      %328 = vmatpush.bf16.msra.mxu0 0
      %329 = vmatpush.bf16.msra.mxu0 0
      %330 = vmatpush.bf16.msra.mxu0 0
      %331 = vmatpush.bf16.msra.mxu0 0
      %332 = vmatpush.bf16.msra.mxu0 0
      %333 = vmatpush.bf16.msra.mxu0 %v306
      %334 = vmatpush.bf16.msra.mxu0 %v289
      %335 = vmatmul.bf16.gmra.mxu0 %v296
      %v336 = vpop.f32.mrf.mxu0
      %v337 = vadd.f32 %v252, %v336
      %v338 = vpop.f32.mrf.mxu0
      %v339 = vadd.f32 %v257, %v338
      %340 = vmatmul.bf16.gmra.mxu0 %v299
      %v341 = vpop.f32.mrf.mxu0
      %v342 = vadd.f32 %v262, %v341
      %v343 = vpop.f32.mrf.mxu0
      %v344 = vadd.f32 %v267, %v343
      %345 = vdwg.mxu0
      %vm346 = vcmp.ge.f32.partialorder %v318, 0.0
      %vm347 = vcmp.ge.f32.partialorder %v337, 0.0
      %vm348 = vcmp.ge.f32.partialorder %v320, 0.0
      %vm349 = vcmp.ge.f32.partialorder %v339, 0.0
      %vm350 = vcmp.ge.f32.partialorder %v323, 0.0
      %vm351 = vcmp.ge.f32.partialorder %v342, 0.0
      %vm352 = vcmp.ge.f32.partialorder %v325, 0.0
      %vm353 = vcmp.ge.f32.partialorder %v344, 0.0
      %v354 = vld [vmem:[%s3] sm:$0xff]
      %v355 = vld [vmem:[%s3 + $0x8] sm:$0xff]
      %v356 = vld [vmem:[%s3 + $0x10] sm:$0xff]
      %v357 = vld [vmem:[%s3 + $0x18] sm:$0x3f]
      %359 = vset.pattern.permute.xlu0 0
      %360 = vperm.xlu0 %359, %v354
      %v361 = vpop.permute.xlu0 %360
      %364 = vset.pattern.permute.xlu0 0
      %365 = vperm.xlu0 %364, %v355
      %v366 = vpop.permute.xlu0 %365
      %369 = vset.pattern.permute.xlu0 0
      %370 = vperm.xlu0 %369, %v356
      %v371 = vpop.permute.xlu0 %370
      %374 = vset.pattern.permute.xlu0 0
      %375 = vperm.xlu0 %374, %v357
      %v376 = vpop.permute.xlu0 %375
      %v378 = vmul.f32 %v361, %v318
      %v379 = vmul.f32 %v361, %v337
      %v380 = vmul.f32 %v366, %v320
      %v381 = vmul.f32 %v366, %v339
      %v382 = vmul.f32 %v371, %v323
      %v383 = vmul.f32 %v371, %v342
      %v384 = vmul.f32 %v376, %v325
      %v385 = vmul.f32 %v376, %v344
      %v386 = vsel %vm346, %v318, %v378
      %v387 = vsel %vm347, %v337, %v379
      %v388 = vsel %vm348, %v320, %v380
      %v389 = vsel %vm349, %v339, %v381
      %v390 = vsel %vm350, %v323, %v382
      %v391 = vsel %vm351, %v342, %v383
      %v392 = vsel %vm352, %v325, %v384
      %v393 = vsel %vm353, %v344, %v385
      %394 = vst [vmem:[%s235] sm:$0xff] %v386
      %395 = vst [vmem:[%s235 + $0x8] sm:$0xff] %v387
      %396 = vst [vmem:[%s235 + $0x10] sm:$0xff] %v388
      %397 = vst [vmem:[%s235 + $0x18] sm:$0xff] %v389
      %398 = vst [vmem:[%s235 + $0x20] sm:$0xff] %v390
      %399 = vst [vmem:[%s235 + $0x28] sm:$0xff] %v391
      %400 = vst [vmem:[%s235 + $0x30] sm:$0x3f] %v392
      %401 = vst [vmem:[%s235 + $0x38] sm:$0x3f] %v393
      %s402 = smul.u32 2, %s20
      %p403 = scmp.lt.s32.totalorder %s19, 3
      %s404 = scalar_select %p403, %s19, 3
      %p405 = scmp.lt.s32.totalorder %s402, 1
      %s406 = scalar_select %p405, %s402, 1
      %s407 = smul.addr %s404, 8
      %s408 = sadd.s32 %s406, %s407
      %s409 = smul.addr %s408, 8
      %s410 = scalar_lea.vmem %s4, %s409
      // Predicated region
      $region37: #{_lambda_.3} parent=35 // pred_check
        %p411 = pneg %p138
      $region38: #{_lambda_.3} parent=35 // pred_check_branch
        %413 = sbr.rel (%p411) target = $region40
      $region39: #{_lambda_.3} parent=35 // pred_region
        %s414 = smul.u32 2, %s20
      $region40: #{_lambda_.3} parent=35 // pred_fallthru
        _
    $region36: #{_lambda_.3} parent=5 // pred_fallthru
      _
    %p415 = scmp.le.s32.totalorder 2, %s10
    // Predicated region
    $region41: #{_lambda_.3} parent=5 // pred_check
      %p416 = pneg %p415
    $region42: #{_lambda_.3} parent=5 // pred_check_branch
      %418 = sbr.rel (%p416) target = $region44
    $region43: #{_lambda_.3} parent=5 // pred_region
      %s419 = ssub.s32 %s10, 2
      // Predicated region
      $region45: #{_lambda_.3} parent=43 // pred_check
        %p420 = pneg %p144
      $region46: #{_lambda_.3} parent=43 // pred_check_branch
        %422 = sbr.rel (%p420) target = $region48
      $region47: #{_lambda_.3} parent=43 // pred_region
        %s423 = smul.u32 2, %s22
        %p424 = scmp.lt.s32.totalorder %s21, 3
        %s425 = scalar_select %p424, %s21, 3
        %p426 = scmp.lt.s32.totalorder %s423, 1
        %s427 = scalar_select %p426, %s423, 1
        %s428 = smul.addr %s425, 8
        %s429 = sadd.s32 %s427, %s428
        %s430 = smul.addr %s429, 8
        %s431 = scalar_lea.vmem %s4, %s430
      $region48: #{_lambda_.3} parent=43 // pred_fallthru
        _
    $region44: #{_lambda_.3} parent=5 // pred_fallthru
      _
  $region6: #{_lambda_.3} parent=0 // loop_footer
    %s14 = sadd.s32 1, %s10
  $region7: #{_lambda_.3} parent=0 // loop_footer_branch
    %9 = sbr.rel target = $region3
  $region8: #{_lambda_.3} parent=0 // loop_exit
    _

// kernel: _lambda_.4
$region0: #{_lambda_.4}
  #allocation0 [shape = 'u32[]', space=smem, size = 0x4, offset = 0x4, fixed_abs, tag = 'smem constant byte address 0x4 - core index']
  #allocation1 [shape = 'u32[72,128]{1,0:T(1,128)}', space=vmem, size = 0x9000, scoped, tag = 'internal scratch']
  %s0 = inlined_call_operand.vmem [shape: bf16[2,270,256], index: 0, kind: input, shape index: {}]
  %s1 = inlined_call_operand.vmem [shape: bf16[2,270,256], index: 1, kind: input, shape index: {}]
  %s2 = inlined_call_operand.vmem [shape: bf16[30,270], index: 2, kind: input, shape index: {}]
  %s3 = inlined_call_operand.vmem [shape: bf16[30,270], index: 3, kind: input, shape index: {}]
  %s4 = inlined_call_operand.vmem [shape: f32[30,1], index: 4, kind: input, shape index: {}]
  %s5 = inlined_call_operand.vmem [shape: f32[30,1], index: 5, kind: input, shape index: {}]
  %s6 = inlined_call_operand.vmem [shape: f32[2,30,256], index: 6, kind: output, shape index: {0}]
  %s7 = inlined_call_operand.vmem [shape: f32[2,30,256], index: 7, kind: output, shape index: {1}]
  %8 = xla_tuple %s6, %s7
  %s9 = sld [smem:[#allocation0]]
  $region65: #{_lambda_.4} parent=0
    _
  %s11 = ssub.s32 1, %s9
  %s12 = scalar_select 0, %s11, %s9
  loop: start=0, step=1, limit=4
  $region2: #{_lambda_.4} parent=0 // loop_pre_header
    _
  $region3: #{_lambda_.4} parent=0 // loop_header
    %s14 = sphi 0, %s18
    %p15 = scmp.ge.s32.totalorder %s14, 4
    %s21 = sphi 0, %s33
    %s22 = sphi 0, %s29
    %s23 = sphi 0, %s21
    %s24 = sphi 0, %s22
    %s25 = sphi 0, %s23
    %s26 = sphi 0, %s24
    %s38 = sphi 0, %s40
    %s41 = sphi 0, %s38
    %s42 = sphi 0, %s41
    %s58 = sphi 0, %s42
    %s66 = sphi 0, %s68
    %s69 = sphi 0, %s66
    %s70 = sphi 0, %s69
    %s86 = sphi 0, %s70
    %s90 = sphi 0, %s90
    %s92 = sphi 0, %s90
    %s93 = sphi 0, %s92
    %s107 = sphi 0, %s93
    %s111 = sphi 0, %s111
    %s113 = sphi 0, %s111
    %s114 = sphi 0, %s113
    %s128 = sphi 0, %s114
    %s132 = sphi 0, %s132
    %s134 = sphi 0, %s132
    %s135 = sphi 0, %s134
    %s149 = sphi 0, %s135
    %s153 = sphi 0, %s153
    %s155 = sphi 0, %s153
    %s156 = sphi 0, %s155
    %s170 = sphi 0, %s156
    %s178 = sphi 0, %s180
    %s181 = sphi 0, %s178
    %s182 = sphi 0, %s181
    %s198 = sphi 0, %s182
    %s206 = sphi 0, %s208
    %s209 = sphi 0, %s206
    %s210 = sphi 0, %s209
    %s226 = sphi 0, %s210
  $region4: #{_lambda_.4} parent=0 // loop_header_branch
    %17 = sbr.rel (%p15) target = $region8
  $region5: #{_lambda_.4} parent=0 // loop_body
    %s19 = ssub.s32 %s14, 1
    %s20 = ssub.s32 %s14, 2
    %s27 = sadd.s32 1, %s22
    %p28 = scmp.ge.s32.totalorder %s27, 1
    %s29 = scalar_select %p28, 0, %s27
    %s30 = sadd.s32 1, %s21
    %s31 = scalar_select %p28, %s30, %s21
    %p32 = scmp.ge.s32.totalorder %s31, 2
    %s33 = scalar_select %p32, 0, %s31
    %s34 = ssub.s32 %s21, %s33
    %s35 = ssub.s32 %s22, %s29
    %s36 = sor.u32 %s34, %s35
    %p37 = scmp.eq.s32.totalorder %s36, 0
    %s39 = sadd.s32 %s38, 1
    %s40 = scalar_select %p37, %s38, %s39
    %p43 = pneg %p37
    %p44 = scmp.eq.s32.totalorder %s14, 1
    %p45 = por %p43, %p44
    %p46 = scmp.ne.s32.totalorder %s38, %s41
    %p47 = scmp.eq.s32.totalorder %s14, 0
    %p48 = por %p46, %p47
    %p49 = scmp.ne.s32.totalorder %s38, %s41
    %p50 = scmp.eq.s32.totalorder %s19, 1
    %p51 = por %p49, %p50
    %p52 = scmp.ne.s32.totalorder %s41, %s42
    %p53 = scmp.eq.s32.totalorder %s19, 0
    %p54 = por %p52, %p53
    %p55 = scmp.ne.s32.totalorder %s41, %s42
    %p56 = scmp.eq.s32.totalorder %s20, 1
    %p57 = por %p55, %p56
    %p59 = scmp.ne.s32.totalorder %s42, %s58
    %p60 = scmp.eq.s32.totalorder %s20, 0
    %p61 = por %p59, %p60
    %s62 = ssub.s32 %s21, %s33
    %s63 = ssub.s32 %s22, %s29
    %s64 = sor.u32 %s62, %s63
    %p65 = scmp.eq.s32.totalorder %s64, 0
    %s67 = sadd.s32 %s66, 1
    %s68 = scalar_select %p65, %s66, %s67
    %p71 = pneg %p65
    %p72 = scmp.eq.s32.totalorder %s14, 1
    %p73 = por %p71, %p72
    %p74 = scmp.ne.s32.totalorder %s66, %s69
    %p75 = scmp.eq.s32.totalorder %s14, 0
    %p76 = por %p74, %p75
    %p77 = scmp.ne.s32.totalorder %s66, %s69
    %p78 = scmp.eq.s32.totalorder %s19, 1
    %p79 = por %p77, %p78
    %p80 = scmp.ne.s32.totalorder %s69, %s70
    %p81 = scmp.eq.s32.totalorder %s19, 0
    %p82 = por %p80, %p81
    %p83 = scmp.ne.s32.totalorder %s69, %s70
    %p84 = scmp.eq.s32.totalorder %s20, 1
    %p85 = por %p83, %p84
    %p87 = scmp.ne.s32.totalorder %s70, %s86
    %p88 = scmp.eq.s32.totalorder %s20, 0
    %p89 = por %p87, %p88
    %s91 = sadd.s32 %s90, 1
    %p94 = scmp.eq.s32.totalorder %s14, 1
    %p95 = scmp.ne.s32.totalorder %s90, %s92
    %p96 = scmp.eq.s32.totalorder %s14, 0
    %p97 = por %p95, %p96
    %p98 = scmp.ne.s32.totalorder %s90, %s92
    %p99 = scmp.eq.s32.totalorder %s19, 1
    %p100 = por %p98, %p99
    %p101 = scmp.ne.s32.totalorder %s92, %s93
    %p102 = scmp.eq.s32.totalorder %s19, 0
    %p103 = por %p101, %p102
    %p104 = scmp.ne.s32.totalorder %s92, %s93
    %p105 = scmp.eq.s32.totalorder %s20, 1
    %p106 = por %p104, %p105
    %p108 = scmp.ne.s32.totalorder %s93, %s107
    %p109 = scmp.eq.s32.totalorder %s20, 0
    %p110 = por %p108, %p109
    %s112 = sadd.s32 %s111, 1
    %p115 = scmp.eq.s32.totalorder %s14, 1
    %p116 = scmp.ne.s32.totalorder %s111, %s113
    %p117 = scmp.eq.s32.totalorder %s14, 0
    %p118 = por %p116, %p117
    %p119 = scmp.ne.s32.totalorder %s111, %s113
    %p120 = scmp.eq.s32.totalorder %s19, 1
    %p121 = por %p119, %p120
    %p122 = scmp.ne.s32.totalorder %s113, %s114
    %p123 = scmp.eq.s32.totalorder %s19, 0
    %p124 = por %p122, %p123
    %p125 = scmp.ne.s32.totalorder %s113, %s114
    %p126 = scmp.eq.s32.totalorder %s20, 1
    %p127 = por %p125, %p126
    %p129 = scmp.ne.s32.totalorder %s114, %s128
    %p130 = scmp.eq.s32.totalorder %s20, 0
    %p131 = por %p129, %p130
    %s133 = sadd.s32 %s132, 1
    %p136 = scmp.eq.s32.totalorder %s14, 1
    %p137 = scmp.ne.s32.totalorder %s132, %s134
    %p138 = scmp.eq.s32.totalorder %s14, 0
    %p139 = por %p137, %p138
    %p140 = scmp.ne.s32.totalorder %s132, %s134
    %p141 = scmp.eq.s32.totalorder %s19, 1
    %p142 = por %p140, %p141
    %p143 = scmp.ne.s32.totalorder %s134, %s135
    %p144 = scmp.eq.s32.totalorder %s19, 0
    %p145 = por %p143, %p144
    %p146 = scmp.ne.s32.totalorder %s134, %s135
    %p147 = scmp.eq.s32.totalorder %s20, 1
    %p148 = por %p146, %p147
    %p150 = scmp.ne.s32.totalorder %s135, %s149
    %p151 = scmp.eq.s32.totalorder %s20, 0
    %p152 = por %p150, %p151
    %s154 = sadd.s32 %s153, 1
    %p157 = scmp.eq.s32.totalorder %s14, 1
    %p158 = scmp.ne.s32.totalorder %s153, %s155
    %p159 = scmp.eq.s32.totalorder %s14, 0
    %p160 = por %p158, %p159
    %p161 = scmp.ne.s32.totalorder %s153, %s155
    %p162 = scmp.eq.s32.totalorder %s19, 1
    %p163 = por %p161, %p162
    %p164 = scmp.ne.s32.totalorder %s155, %s156
    %p165 = scmp.eq.s32.totalorder %s19, 0
    %p166 = por %p164, %p165
    %p167 = scmp.ne.s32.totalorder %s155, %s156
    %p168 = scmp.eq.s32.totalorder %s20, 1
    %p169 = por %p167, %p168
    %p171 = scmp.ne.s32.totalorder %s156, %s170
    %p172 = scmp.eq.s32.totalorder %s20, 0
    %p173 = por %p171, %p172
    %s174 = ssub.s32 %s21, %s33
    %s175 = ssub.s32 %s22, %s29
    %s176 = sor.u32 %s174, %s175
    %p177 = scmp.eq.s32.totalorder %s176, 0
    %s179 = sadd.s32 %s178, 1
    %s180 = scalar_select %p177, %s178, %s179
    %p183 = pneg %p177
    %p184 = scmp.eq.s32.totalorder %s14, 1
    %p185 = por %p183, %p184
    %p186 = scmp.ne.s32.totalorder %s178, %s181
    %p187 = scmp.eq.s32.totalorder %s14, 0
    %p188 = por %p186, %p187
    %p189 = scmp.ne.s32.totalorder %s178, %s181
    %p190 = scmp.eq.s32.totalorder %s19, 1
    %p191 = por %p189, %p190
    %p192 = scmp.ne.s32.totalorder %s181, %s182
    %p193 = scmp.eq.s32.totalorder %s19, 0
    %p194 = por %p192, %p193
    %p195 = scmp.ne.s32.totalorder %s181, %s182
    %p196 = scmp.eq.s32.totalorder %s20, 1
    %p197 = por %p195, %p196
    %p199 = scmp.ne.s32.totalorder %s182, %s198
    %p200 = scmp.eq.s32.totalorder %s20, 0
    %p201 = por %p199, %p200
    %s202 = ssub.s32 %s21, %s33
    %s203 = ssub.s32 %s22, %s29
    %s204 = sor.u32 %s202, %s203
    %p205 = scmp.eq.s32.totalorder %s204, 0
    %s207 = sadd.s32 %s206, 1
    %s208 = scalar_select %p205, %s206, %s207
    %p211 = pneg %p205
    %p212 = scmp.eq.s32.totalorder %s14, 1
    %p213 = por %p211, %p212
    %p214 = scmp.ne.s32.totalorder %s206, %s209
    %p215 = scmp.eq.s32.totalorder %s14, 0
    %p216 = por %p214, %p215
    %p217 = scmp.ne.s32.totalorder %s206, %s209
    %p218 = scmp.eq.s32.totalorder %s19, 1
    %p219 = por %p217, %p218
    %p220 = scmp.ne.s32.totalorder %s209, %s210
    %p221 = scmp.eq.s32.totalorder %s19, 0
    %p222 = por %p220, %p221
    %p223 = scmp.ne.s32.totalorder %s209, %s210
    %p224 = scmp.eq.s32.totalorder %s20, 1
    %p225 = por %p223, %p224
    %p227 = scmp.ne.s32.totalorder %s210, %s226
    %p228 = scmp.eq.s32.totalorder %s20, 0
    %p229 = por %p227, %p228
    %p230 = scmp.le.s32.totalorder 1, %s14
    %p231 = scmp.lt.s32.totalorder %s14, 3
    %p232 = pnand %p230, %p231
    %p233 = pneg %p232
    // Predicated region
    $region9: #{_lambda_.4} parent=5 // pred_check
      _
    $region10: #{_lambda_.4} parent=5 // pred_check_branch
      %235 = sbr.rel (%p232) target = $region12
    $region11: #{_lambda_.4} parent=5 // pred_region
      %s236 = ssub.s32 %s14, 1
      // Predicated region
      $region13: #{_lambda_.4} parent=11 // pred_check
        %p237 = pneg %p103
      $region14: #{_lambda_.4} parent=11 // pred_check_branch
        %239 = sbr.rel (%p237) target = $region16
      $region15: #{_lambda_.4} parent=11 // pred_region
        _
      $region16: #{_lambda_.4} parent=11 // pred_fallthru
        _
      // Predicated region
      $region17: #{_lambda_.4} parent=11 // pred_check
        %p240 = pneg %p124
      $region18: #{_lambda_.4} parent=11 // pred_check_branch
        %242 = sbr.rel (%p240) target = $region20
      $region19: #{_lambda_.4} parent=11 // pred_region
        _
      $region20: #{_lambda_.4} parent=11 // pred_fallthru
        _
      // Predicated region
      $region21: #{_lambda_.4} parent=11 // pred_check
        %p243 = pneg %p145
      $region22: #{_lambda_.4} parent=11 // pred_check_branch
        %245 = sbr.rel (%p243) target = $region24
      $region23: #{_lambda_.4} parent=11 // pred_region
        _
      $region24: #{_lambda_.4} parent=11 // pred_fallthru
        _
      // Predicated region
      $region25: #{_lambda_.4} parent=11 // pred_check
        %p246 = pneg %p166
      $region26: #{_lambda_.4} parent=11 // pred_check_branch
        %248 = sbr.rel (%p246) target = $region28
      $region27: #{_lambda_.4} parent=11 // pred_region
        _
      $region28: #{_lambda_.4} parent=11 // pred_fallthru
        _
    $region12: #{_lambda_.4} parent=5 // pred_fallthru
      _
    %p249 = scmp.lt.s32.totalorder %s14, 2
    // Predicated region
    $region29: #{_lambda_.4} parent=5 // pred_check
      %p250 = pneg %p249
    $region30: #{_lambda_.4} parent=5 // pred_check_branch
      %252 = sbr.rel (%p250) target = $region32
    $region31: #{_lambda_.4} parent=5 // pred_region
      // Predicated region
      $region33: #{_lambda_.4} parent=31 // pred_check
        %p253 = pneg %p48
      $region34: #{_lambda_.4} parent=31 // pred_check_branch
        %255 = sbr.rel (%p253) target = $region36
      $region35: #{_lambda_.4} parent=31 // pred_region
        %s256 = smul.u32 2, %s22
        %p257 = scmp.lt.s32.totalorder %s21, 1
        %s258 = scalar_select %p257, %s21, 1
        %p259 = scmp.lt.s32.totalorder %s256, 1
        %s260 = scalar_select %p259, %s256, 1
        %s261 = smul.addr %s258, 68
        %s262 = sadd.s32 %s260, %s261
        %s263 = smul.addr %s262, 4
        %s264 = scalar_lea.vmem %s0, %s263
        %s265 = smul.u32 2, %s22
      $region36: #{_lambda_.4} parent=31 // pred_fallthru
        _
      // Predicated region
      $region37: #{_lambda_.4} parent=31 // pred_check
        %p266 = pneg %p76
      $region38: #{_lambda_.4} parent=31 // pred_check_branch
        %268 = sbr.rel (%p266) target = $region40
      $region39: #{_lambda_.4} parent=31 // pred_region
        %s269 = smul.u32 2, %s22
        %p270 = scmp.lt.s32.totalorder %s21, 1
        %s271 = scalar_select %p270, %s21, 1
        %p272 = scmp.lt.s32.totalorder %s269, 1
        %s273 = scalar_select %p272, %s269, 1
        %s274 = smul.addr %s271, 68
        %s275 = sadd.s32 %s273, %s274
        %s276 = smul.addr %s275, 4
        %s277 = scalar_lea.vmem %s1, %s276
        %s278 = smul.u32 2, %s22
      $region40: #{_lambda_.4} parent=31 // pred_fallthru
        _
    $region32: #{_lambda_.4} parent=5 // pred_fallthru
      _
    %p279 = scmp.le.s32.totalorder 1, %s14
    %p280 = scmp.lt.s32.totalorder %s14, 3
    %p281 = pnand %p279, %p280
    %p282 = pneg %p281
    // Predicated region
    $region41: #{_lambda_.4} parent=5 // pred_check
      _
    $region42: #{_lambda_.4} parent=5 // pred_check_branch
      %284 = sbr.rel (%p281) target = $region44
    $region43: #{_lambda_.4} parent=5 // pred_region
      %s285 = ssub.s32 %s14, 1
      %s286 = smul.u32 2, %s24
      %p287 = scmp.lt.s32.totalorder %s23, 1
      %s288 = scalar_select %p287, %s23, 1
      %p289 = scmp.lt.s32.totalorder %s286, 1
      %s290 = scalar_select %p289, %s286, 1
      %s291 = smul.addr %s288, 68
      %s292 = sadd.s32 %s290, %s291
      %s293 = smul.addr %s292, 4
      %s294 = scalar_lea.vmem %s0, %s293
      %p295 = pneg %p54
      %p296 = pneg %p51
      %s297 = smul.u32 2, %s24
      %p298 = scmp.lt.s32.totalorder %s23, 1
      %s299 = scalar_select %p298, %s23, 1
      %p300 = scmp.lt.s32.totalorder %s297, 1
      %s301 = scalar_select %p300, %s297, 1
      %s302 = smul.addr %s299, 68
      %s303 = sadd.s32 %s301, %s302
      %s304 = smul.addr %s303, 4
      %s305 = scalar_lea.vmem %s1, %s304
      %p306 = pneg %p82
      %p307 = pneg %p79
      %p308 = pneg %p103
      %p309 = pneg %p100
      %p310 = pneg %p124
      %p311 = pneg %p121
      %p312 = pneg %p145
      %p313 = pneg %p142
      %p314 = pneg %p166
      %p315 = pneg %p163
      %p316 = pneg %p194
      %p317 = pneg %p191
      %s318 = smul.u32 2, %s24
      %p319 = scmp.lt.s32.totalorder %s23, 1
      %s320 = scalar_select %p319, %s23, 1
      %p321 = scmp.lt.s32.totalorder %s318, 1
      %s322 = scalar_select %p321, %s318, 1
      %s323 = smul.addr %s320, 8
      %s324 = sadd.s32 %s322, %s323
      %s325 = smul.addr %s324, 8
      %s326 = scalar_lea.vmem %s6, %s325
      %p327 = pneg %p222
      %p328 = pneg %p219
      %s329 = smul.u32 2, %s24
      %p330 = scmp.lt.s32.totalorder %s23, 1
      %s331 = scalar_select %p330, %s23, 1
      %p332 = scmp.lt.s32.totalorder %s329, 1
      %s333 = scalar_select %p332, %s329, 1
      %s334 = smul.addr %s331, 8
      %s335 = sadd.s32 %s333, %s334
      %s336 = smul.addr %s335, 8
      %s337 = scalar_lea.vmem %s7, %s336
      %s338 = smul.u32 2, %s24
      %p339 = scmp.lt.s32.totalorder %s23, 1
      %s340 = scalar_select %p339, %s23, 1
      %p341 = scmp.lt.s32.totalorder %s338, 1
      %s342 = scalar_select %p341, %s338, 1
      %s343 = smul.addr %s340, 68
      %s344 = sadd.s32 %s342, %s343
      %s345 = smul.addr %s344, 4
      %s346 = scalar_lea.vmem %s0, %s345
      %s347 = smul.u32 2, %s24
      %s348 = smul.u32 2, %s24
      %p349 = scmp.lt.s32.totalorder %s23, 1
      %s350 = scalar_select %p349, %s23, 1
      %p351 = scmp.lt.s32.totalorder %s348, 1
      %s352 = scalar_select %p351, %s348, 1
      %s353 = smul.addr %s350, 68
      %s354 = sadd.s32 %s352, %s353
      %s355 = smul.addr %s354, 4
      %s356 = scalar_lea.vmem %s1, %s355
      %s357 = smul.u32 2, %s24
      %s358 = smul.u32 2, %s24
      %p359 = scmp.lt.s32.totalorder %s23, 1
      %s360 = scalar_select %p359, %s23, 1
      %p361 = scmp.lt.s32.totalorder %s358, 1
      %s362 = scalar_select %p361, %s358, 1
      %s363 = smul.addr %s360, 8
      %s364 = sadd.s32 %s362, %s363
      %s365 = smul.addr %s364, 8
      %s366 = scalar_lea.vmem %s6, %s365
      %s367 = smul.u32 2, %s24
      %s368 = smul.u32 2, %s24
      %p369 = scmp.lt.s32.totalorder %s23, 1
      %s370 = scalar_select %p369, %s23, 1
      %p371 = scmp.lt.s32.totalorder %s368, 1
      %s372 = scalar_select %p371, %s368, 1
      %s373 = smul.addr %s370, 8
      %s374 = sadd.s32 %s372, %s373
      %s375 = smul.addr %s374, 8
      %s376 = scalar_lea.vmem %s7, %s375
      %s377 = smul.u32 2, %s24
      %v379 = vld [vmem:[%s3] sm:$0xff]
      %v380 = vld [vmem:[%s3 + $0x8] sm:$0xf]
      %v381 = vld [vmem:[%s3 + $0xc] sm:$0xff]
      %v382 = vld [vmem:[%s3 + $0x14] sm:$0xf]
      %v383 = vld [vmem:[%s3 + $0x18] sm:$0xff]
      %v384 = vld [vmem:[%s3 + $0x20] sm:$0xf]
      %v385 = vld [vmem:[%s3 + $0x24] sm:$0x77]
      %v386 = vld [vmem:[%s3 + $0x2c] sm:$0x7]
      %v387 = vld [vmem:[%s356] sm:$0xff]
      %v388 = vld [vmem:[%s356 + $0x8] sm:$0xff]
      %v389 = vld [vmem:[%s356 + $0x10] sm:$0xff]
      %v390 = vld [vmem:[%s356 + $0x18] sm:$0xff]
      %v391 = vld [vmem:[%s356 + $0x20] sm:$0xff]
      %v392 = vld [vmem:[%s356 + $0x28] sm:$0xff]
      %v393 = vld [vmem:[%s356 + $0x30] sm:$0xff]
      %v394 = vld [vmem:[%s356 + $0x38] sm:$0xff]
      %v395 = vld [vmem:[%s356 + $0x40] sm:$0xff]
      %v396 = vld [vmem:[%s356 + $0x48] sm:$0xff]
      %v397 = vld [vmem:[%s356 + $0x50] sm:$0xff]
      %v398 = vld [vmem:[%s356 + $0x58] sm:$0xff]
      %v399 = vld [vmem:[%s356 + $0x60] sm:$0xff]
      %v400 = vld [vmem:[%s356 + $0x68] sm:$0xff]
      %v401 = vld [vmem:[%s356 + $0x70] sm:$0xff]
      %v402 = vld [vmem:[%s356 + $0x78] sm:$0xff]
      %v403 = vld [vmem:[%s356 + $0x80] sm:$0xff]
      %v404 = vld [vmem:[%s356 + $0x88] sm:$0xff]
      %v405 = vld [vmem:[%s356 + $0x90] sm:$0xff]
      %v406 = vld [vmem:[%s356 + $0x98] sm:$0xff]
      %v407 = vld [vmem:[%s356 + $0xa0] sm:$0xff]
      %v408 = vld [vmem:[%s356 + $0xa8] sm:$0xff]
      %v409 = vld [vmem:[%s356 + $0xb0] sm:$0xff]
      %v410 = vld [vmem:[%s356 + $0xb8] sm:$0xff]
      %v411 = vld [vmem:[%s356 + $0xc0] sm:$0xff]
      %v412 = vld [vmem:[%s356 + $0xc8] sm:$0xff]
      %v413 = vld [vmem:[%s356 + $0xd0] sm:$0xff]
      %v414 = vld [vmem:[%s356 + $0xd8] sm:$0xff]
      %v415 = vld [vmem:[%s356 + $0xe0] sm:$0xff]
      %v416 = vld [vmem:[%s356 + $0xe8] sm:$0xff]
      %v417 = vld [vmem:[%s356 + $0xf0] sm:$0xff]
      %v418 = vld [vmem:[%s356 + $0xf8] sm:$0xff]
      %v419 = vld [vmem:[%s356 + $0x100] sm:$0xff]
      %v420 = vld [vmem:[%s356 + $0x108] sm:$0x77]
      %v429 = vunpack.c.l.b16 %v379
      %v430 = vunpack.c.h.b16 %v379
      %v431 = vunpack.c.l.b16 %v380
      %v432 = vunpack.c.l.b16 %v381
      %v433 = vunpack.c.h.b16 %v381
      %v434 = vunpack.c.l.b16 %v382
      %v435 = vunpack.c.l.b16 %v383
      %v436 = vunpack.c.h.b16 %v383
      %v437 = vunpack.c.l.b16 %v384
      %v438 = vunpack.c.l.b16 %v385
      %v439 = vunpack.c.h.b16 %v385
      %v440 = vunpack.c.l.b16 %v386
      %v441 = vpack.c.b16 %v432, %v429
      %v442 = vpack.c.b16 %v433, %v430
      %v443 = vpack.c.b16 %v434, %v431
      %v444 = vpack.c.b16 %v438, %v435
      %v445 = vpack.c.b16 %v439, %v436
      %v446 = vpack.c.b16 %v440, %v437
      %v485 = vunpack.c.l.b16 %v387
      %v486 = vunpack.c.h.b16 %v387
      %v487 = vunpack.c.l.b16 %v388
      %v488 = vunpack.c.h.b16 %v388
      %v489 = vunpack.c.l.b16 %v389
      %v490 = vunpack.c.h.b16 %v389
      %v491 = vunpack.c.l.b16 %v390
      %v492 = vunpack.c.h.b16 %v390
      %v493 = vunpack.c.l.b16 %v391
      %v494 = vunpack.c.h.b16 %v391
      %v495 = vunpack.c.l.b16 %v392
      %v496 = vunpack.c.h.b16 %v392
      %v497 = vunpack.c.l.b16 %v393
      %v498 = vunpack.c.h.b16 %v393
      %v499 = vunpack.c.l.b16 %v394
      %v500 = vunpack.c.h.b16 %v394
      %v501 = vunpack.c.l.b16 %v395
      %v502 = vunpack.c.h.b16 %v395
      %v503 = vunpack.c.l.b16 %v396
      %v504 = vunpack.c.h.b16 %v396
      %v505 = vunpack.c.l.b16 %v397
      %v506 = vunpack.c.h.b16 %v397
      %v507 = vunpack.c.l.b16 %v398
      %v508 = vunpack.c.h.b16 %v398
      %v509 = vunpack.c.l.b16 %v399
      %v510 = vunpack.c.h.b16 %v399
      %v511 = vunpack.c.l.b16 %v400
      %v512 = vunpack.c.h.b16 %v400
      %v513 = vunpack.c.l.b16 %v401
      %v514 = vunpack.c.h.b16 %v401
      %v515 = vunpack.c.l.b16 %v402
      %v516 = vunpack.c.h.b16 %v402
      %v517 = vunpack.c.l.b16 %v403
      %v518 = vunpack.c.h.b16 %v403
      %v519 = vunpack.c.l.b16 %v404
      %v520 = vunpack.c.h.b16 %v404
      %v521 = vunpack.c.l.b16 %v405
      %v522 = vunpack.c.h.b16 %v405
      %v523 = vunpack.c.l.b16 %v406
      %v524 = vunpack.c.h.b16 %v406
      %v525 = vunpack.c.l.b16 %v407
      %v526 = vunpack.c.h.b16 %v407
      %v527 = vunpack.c.l.b16 %v408
      %v528 = vunpack.c.h.b16 %v408
      %v529 = vunpack.c.l.b16 %v409
      %v530 = vunpack.c.h.b16 %v409
      %v531 = vunpack.c.l.b16 %v410
      %v532 = vunpack.c.h.b16 %v410
      %v533 = vunpack.c.l.b16 %v411
      %v534 = vunpack.c.h.b16 %v411
      %v535 = vunpack.c.l.b16 %v412
      %v536 = vunpack.c.h.b16 %v412
      %v537 = vunpack.c.l.b16 %v413
      %v538 = vunpack.c.h.b16 %v413
      %v539 = vunpack.c.l.b16 %v414
      %v540 = vunpack.c.h.b16 %v414
      %v541 = vunpack.c.l.b16 %v415
      %v542 = vunpack.c.h.b16 %v415
      %v543 = vunpack.c.l.b16 %v416
      %v544 = vunpack.c.h.b16 %v416
      %v545 = vunpack.c.l.b16 %v417
      %v546 = vunpack.c.h.b16 %v417
      %v547 = vunpack.c.l.b16 %v418
      %v548 = vunpack.c.h.b16 %v418
      %v549 = vunpack.c.l.b16 %v419
      %v550 = vunpack.c.h.b16 %v419
      %v551 = vunpack.c.l.b16 %v420
      %v552 = vunpack.c.h.b16 %v420
      %v553 = vpack.c.b16 %v487, %v485
      %v554 = vpack.c.b16 %v488, %v486
      %v555 = vpack.c.b16 %v491, %v489
      %v556 = vpack.c.b16 %v492, %v490
      %v557 = vpack.c.b16 %v495, %v493
      %v558 = vpack.c.b16 %v496, %v494
      %v559 = vpack.c.b16 %v499, %v497
      %v560 = vpack.c.b16 %v500, %v498
      %v561 = vpack.c.b16 %v503, %v501
      %v562 = vpack.c.b16 %v504, %v502
      %v563 = vpack.c.b16 %v507, %v505
      %v564 = vpack.c.b16 %v508, %v506
      %v565 = vpack.c.b16 %v511, %v509
      %v566 = vpack.c.b16 %v512, %v510
      %v567 = vpack.c.b16 %v515, %v513
      %v568 = vpack.c.b16 %v516, %v514
      %v569 = vpack.c.b16 %v519, %v517
      %v570 = vpack.c.b16 %v520, %v518
      %v571 = vpack.c.b16 %v523, %v521
      %v572 = vpack.c.b16 %v524, %v522
      %v573 = vpack.c.b16 %v527, %v525
      %v574 = vpack.c.b16 %v528, %v526
      %v575 = vpack.c.b16 %v531, %v529
      %v576 = vpack.c.b16 %v532, %v530
      %v577 = vpack.c.b16 %v535, %v533
      %v578 = vpack.c.b16 %v536, %v534
      %v579 = vpack.c.b16 %v539, %v537
      %v580 = vpack.c.b16 %v540, %v538
      %v581 = vpack.c.b16 %v543, %v541
      %v582 = vpack.c.b16 %v544, %v542
      %v583 = vpack.c.b16 %v547, %v545
      %v584 = vpack.c.b16 %v548, %v546
      %v585 = vpack.c.b16 %v551, %v549
      %v586 = vpack.c.b16 %v552, %v550
      %vm619 = vcmask 113664
      %v621 = vsel %vm619, %v443, 0
      %v624 = vsel %vm619, %v446, 0
      %vm626 = vcmask 1046528
      %v628 = vsel %vm626, %v585, 0
      %v631 = vsel %vm626, %v586, 0
      %633 = vmatpush.bf16.msra.mxu0 %v567
      %634 = vmatpush.bf16.msra.mxu0 %v565
      %635 = vmatpush.bf16.msra.mxu0 %v563
      %636 = vmatpush.bf16.msra.mxu0 %v561
      %637 = vmatpush.bf16.msra.mxu0 %v559
      %638 = vmatpush.bf16.msra.mxu0 %v557
      %639 = vmatpush.bf16.msra.mxu0 %v555
      %640 = vmatpush.bf16.msra.mxu0 %v553
      %641 = vmatmul.bf16.gmra.mxu0 %v441
      %v642 = vpop.f32.mrf.mxu0
      %v643 = vadd.f32 0.0, %v642
      %v644 = vpop.f32.mrf.mxu0
      %v645 = vadd.f32 0.0, %v644
      %646 = vmatmul.bf16.gmra.mxu0 %v444
      %v647 = vpop.f32.mrf.mxu0
      %v648 = vadd.f32 0.0, %v647
      %v649 = vpop.f32.mrf.mxu0
      %v650 = vadd.f32 0.0, %v649
      %651 = vdwg.mxu0
      %652 = vmatpush.bf16.msra.mxu0 %v583
      %653 = vmatpush.bf16.msra.mxu0 %v581
      %654 = vmatpush.bf16.msra.mxu0 %v579
      %655 = vmatpush.bf16.msra.mxu0 %v577
      %656 = vmatpush.bf16.msra.mxu0 %v575
      %657 = vmatpush.bf16.msra.mxu0 %v573
      %658 = vmatpush.bf16.msra.mxu0 %v571
      %659 = vmatpush.bf16.msra.mxu0 %v569
      %660 = vmatmul.bf16.gmra.mxu0 %v442
      %v661 = vpop.f32.mrf.mxu0
      %v662 = vadd.f32 %v643, %v661
      %v663 = vpop.f32.mrf.mxu0
      %v664 = vadd.f32 %v645, %v663
      %665 = vmatmul.bf16.gmra.mxu0 %v445
      %v666 = vpop.f32.mrf.mxu0
      %v667 = vadd.f32 %v648, %v666
      %v668 = vpop.f32.mrf.mxu0
      %v669 = vadd.f32 %v650, %v668
      %670 = vdwg.mxu0
      %671 = vmatpush.bf16.msra.mxu0 0
      %672 = vmatpush.bf16.msra.mxu0 0
      %673 = vmatpush.bf16.msra.mxu0 0
      %674 = vmatpush.bf16.msra.mxu0 0
      %675 = vmatpush.bf16.msra.mxu0 0
      %676 = vmatpush.bf16.msra.mxu0 0
      %677 = vmatpush.bf16.msra.mxu0 0
      %678 = vmatpush.bf16.msra.mxu0 %v628
      %679 = vmatmul.bf16.gmra.mxu0 %v621
      %v680 = vpop.f32.mrf.mxu0
      %v681 = vadd.f32 %v662, %v680
      %v682 = vpop.f32.mrf.mxu0
      %v683 = vadd.f32 %v664, %v682
      %684 = vmatmul.bf16.gmra.mxu0 %v624
      %v685 = vpop.f32.mrf.mxu0
      %v686 = vadd.f32 %v667, %v685
      %v687 = vpop.f32.mrf.mxu0
      %v688 = vadd.f32 %v669, %v687
      %689 = vdwg.mxu0
      %690 = vmatpush.bf16.msra.mxu0 %v568
      %691 = vmatpush.bf16.msra.mxu0 %v566
      %692 = vmatpush.bf16.msra.mxu0 %v564
      %693 = vmatpush.bf16.msra.mxu0 %v562
      %694 = vmatpush.bf16.msra.mxu0 %v560
      %695 = vmatpush.bf16.msra.mxu0 %v558
      %696 = vmatpush.bf16.msra.mxu0 %v556
      %697 = vmatpush.bf16.msra.mxu0 %v554
      %698 = vmatmul.bf16.gmra.mxu0 %v441
      %v699 = vpop.f32.mrf.mxu0
      %v700 = vadd.f32 0.0, %v699
      %v701 = vpop.f32.mrf.mxu0
      %v702 = vadd.f32 0.0, %v701
      %703 = vmatmul.bf16.gmra.mxu0 %v444
      %v704 = vpop.f32.mrf.mxu0
      %v705 = vadd.f32 0.0, %v704
      %v706 = vpop.f32.mrf.mxu0
      %v707 = vadd.f32 0.0, %v706
      %708 = vdwg.mxu0
      %709 = vmatpush.bf16.msra.mxu0 %v584
      %710 = vmatpush.bf16.msra.mxu0 %v582
      %711 = vmatpush.bf16.msra.mxu0 %v580
      %712 = vmatpush.bf16.msra.mxu0 %v578
      %713 = vmatpush.bf16.msra.mxu0 %v576
      %714 = vmatpush.bf16.msra.mxu0 %v574
      %715 = vmatpush.bf16.msra.mxu0 %v572
      %716 = vmatpush.bf16.msra.mxu0 %v570
      %717 = vmatmul.bf16.gmra.mxu0 %v442
      %v718 = vpop.f32.mrf.mxu0
      %v719 = vadd.f32 %v700, %v718
      %v720 = vpop.f32.mrf.mxu0
      %v721 = vadd.f32 %v702, %v720
      %722 = vmatmul.bf16.gmra.mxu0 %v445
      %v723 = vpop.f32.mrf.mxu0
      %v724 = vadd.f32 %v705, %v723
      %v725 = vpop.f32.mrf.mxu0
      %v726 = vadd.f32 %v707, %v725
      %727 = vdwg.mxu0
      %728 = vmatpush.bf16.msra.mxu0 0
      %729 = vmatpush.bf16.msra.mxu0 0
      %730 = vmatpush.bf16.msra.mxu0 0
      %731 = vmatpush.bf16.msra.mxu0 0
      %732 = vmatpush.bf16.msra.mxu0 0
      %733 = vmatpush.bf16.msra.mxu0 0
      %734 = vmatpush.bf16.msra.mxu0 0
      %735 = vmatpush.bf16.msra.mxu0 %v631
      %736 = vmatmul.bf16.gmra.mxu0 %v621
      %v737 = vpop.f32.mrf.mxu0
      %v738 = vadd.f32 %v719, %v737
      %v739 = vpop.f32.mrf.mxu0
      %v740 = vadd.f32 %v721, %v739
      %741 = vmatmul.bf16.gmra.mxu0 %v624
      %v742 = vpop.f32.mrf.mxu0
      %v743 = vadd.f32 %v724, %v742
      %v744 = vpop.f32.mrf.mxu0
      %v745 = vadd.f32 %v726, %v744
      %746 = vdwg.mxu0
      %v747 = vld [vmem:[%s2] sm:$0xff]
      %v748 = vld [vmem:[%s2 + $0x8] sm:$0xf]
      %v749 = vld [vmem:[%s2 + $0xc] sm:$0xff]
      %v750 = vld [vmem:[%s2 + $0x14] sm:$0xf]
      %v751 = vld [vmem:[%s2 + $0x18] sm:$0xff]
      %v752 = vld [vmem:[%s2 + $0x20] sm:$0xf]
      %v753 = vld [vmem:[%s2 + $0x24] sm:$0x77]
      %v754 = vld [vmem:[%s2 + $0x2c] sm:$0x7]
      %v755 = vld [vmem:[%s346] sm:$0xff]
      %v756 = vld [vmem:[%s346 + $0x8] sm:$0xff]
      %v757 = vld [vmem:[%s346 + $0x10] sm:$0xff]
      %v758 = vld [vmem:[%s346 + $0x18] sm:$0xff]
      %v759 = vld [vmem:[%s346 + $0x20] sm:$0xff]
      %v760 = vld [vmem:[%s346 + $0x28] sm:$0xff]
      %v761 = vld [vmem:[%s346 + $0x30] sm:$0xff]
      %v762 = vld [vmem:[%s346 + $0x38] sm:$0xff]
      %v763 = vld [vmem:[%s346 + $0x40] sm:$0xff]
      %v764 = vld [vmem:[%s346 + $0x48] sm:$0xff]
      %v765 = vld [vmem:[%s346 + $0x50] sm:$0xff]
      %v766 = vld [vmem:[%s346 + $0x58] sm:$0xff]
      %v767 = vld [vmem:[%s346 + $0x60] sm:$0xff]
      %v768 = vld [vmem:[%s346 + $0x68] sm:$0xff]
      %v769 = vld [vmem:[%s346 + $0x70] sm:$0xff]
      %v770 = vld [vmem:[%s346 + $0x78] sm:$0xff]
      %v771 = vld [vmem:[%s346 + $0x80] sm:$0xff]
      %v772 = vld [vmem:[%s346 + $0x88] sm:$0xff]
      %v773 = vld [vmem:[%s346 + $0x90] sm:$0xff]
      %v774 = vld [vmem:[%s346 + $0x98] sm:$0xff]
      %v775 = vld [vmem:[%s346 + $0xa0] sm:$0xff]
      %v776 = vld [vmem:[%s346 + $0xa8] sm:$0xff]
      %v777 = vld [vmem:[%s346 + $0xb0] sm:$0xff]
      %v778 = vld [vmem:[%s346 + $0xb8] sm:$0xff]
      %v779 = vld [vmem:[%s346 + $0xc0] sm:$0xff]
      %v780 = vld [vmem:[%s346 + $0xc8] sm:$0xff]
      %v781 = vld [vmem:[%s346 + $0xd0] sm:$0xff]
      %v782 = vld [vmem:[%s346 + $0xd8] sm:$0xff]
      %v783 = vld [vmem:[%s346 + $0xe0] sm:$0xff]
      %v784 = vld [vmem:[%s346 + $0xe8] sm:$0xff]
      %v785 = vld [vmem:[%s346 + $0xf0] sm:$0xff]
      %v786 = vld [vmem:[%s346 + $0xf8] sm:$0xff]
      %v787 = vld [vmem:[%s346 + $0x100] sm:$0xff]
      %v788 = vld [vmem:[%s346 + $0x108] sm:$0x77]
      %v797 = vunpack.c.l.b16 %v747
      %v798 = vunpack.c.h.b16 %v747
      %v799 = vunpack.c.l.b16 %v748
      %v800 = vunpack.c.l.b16 %v749
      %v801 = vunpack.c.h.b16 %v749
      %v802 = vunpack.c.l.b16 %v750
      %v803 = vunpack.c.l.b16 %v751
      %v804 = vunpack.c.h.b16 %v751
      %v805 = vunpack.c.l.b16 %v752
      %v806 = vunpack.c.l.b16 %v753
      %v807 = vunpack.c.h.b16 %v753
      %v808 = vunpack.c.l.b16 %v754
      %v809 = vpack.c.b16 %v800, %v797
      %v810 = vpack.c.b16 %v801, %v798
      %v811 = vpack.c.b16 %v802, %v799
      %v812 = vpack.c.b16 %v806, %v803
      %v813 = vpack.c.b16 %v807, %v804
      %v814 = vpack.c.b16 %v808, %v805
      %v853 = vunpack.c.l.b16 %v755
      %v854 = vunpack.c.h.b16 %v755
      %v855 = vunpack.c.l.b16 %v756
      %v856 = vunpack.c.h.b16 %v756
      %v857 = vunpack.c.l.b16 %v757
      %v858 = vunpack.c.h.b16 %v757
      %v859 = vunpack.c.l.b16 %v758
      %v860 = vunpack.c.h.b16 %v758
      %v861 = vunpack.c.l.b16 %v759
      %v862 = vunpack.c.h.b16 %v759
      %v863 = vunpack.c.l.b16 %v760
      %v864 = vunpack.c.h.b16 %v760
      %v865 = vunpack.c.l.b16 %v761
      %v866 = vunpack.c.h.b16 %v761
      %v867 = vunpack.c.l.b16 %v762
      %v868 = vunpack.c.h.b16 %v762
      %v869 = vunpack.c.l.b16 %v763
      %v870 = vunpack.c.h.b16 %v763
      %v871 = vunpack.c.l.b16 %v764
      %v872 = vunpack.c.h.b16 %v764
      %v873 = vunpack.c.l.b16 %v765
      %v874 = vunpack.c.h.b16 %v765
      %v875 = vunpack.c.l.b16 %v766
      %v876 = vunpack.c.h.b16 %v766
      %v877 = vunpack.c.l.b16 %v767
      %v878 = vunpack.c.h.b16 %v767
      %v879 = vunpack.c.l.b16 %v768
      %v880 = vunpack.c.h.b16 %v768
      %v881 = vunpack.c.l.b16 %v769
      %v882 = vunpack.c.h.b16 %v769
      %v883 = vunpack.c.l.b16 %v770
      %v884 = vunpack.c.h.b16 %v770
      %v885 = vunpack.c.l.b16 %v771
      %v886 = vunpack.c.h.b16 %v771
      %v887 = vunpack.c.l.b16 %v772
      %v888 = vunpack.c.h.b16 %v772
      %v889 = vunpack.c.l.b16 %v773
      %v890 = vunpack.c.h.b16 %v773
      %v891 = vunpack.c.l.b16 %v774
      %v892 = vunpack.c.h.b16 %v774
      %v893 = vunpack.c.l.b16 %v775
      %v894 = vunpack.c.h.b16 %v775
      %v895 = vunpack.c.l.b16 %v776
      %v896 = vunpack.c.h.b16 %v776
      %v897 = vunpack.c.l.b16 %v777
      %v898 = vunpack.c.h.b16 %v777
      %v899 = vunpack.c.l.b16 %v778
      %v900 = vunpack.c.h.b16 %v778
      %v901 = vunpack.c.l.b16 %v779
      %v902 = vunpack.c.h.b16 %v779
      %v903 = vunpack.c.l.b16 %v780
      %v904 = vunpack.c.h.b16 %v780
      %v905 = vunpack.c.l.b16 %v781
      %v906 = vunpack.c.h.b16 %v781
      %v907 = vunpack.c.l.b16 %v782
      %v908 = vunpack.c.h.b16 %v782
      %v909 = vunpack.c.l.b16 %v783
      %v910 = vunpack.c.h.b16 %v783
      %v911 = vunpack.c.l.b16 %v784
      %v912 = vunpack.c.h.b16 %v784
      %v913 = vunpack.c.l.b16 %v785
      %v914 = vunpack.c.h.b16 %v785
      %v915 = vunpack.c.l.b16 %v786
      %v916 = vunpack.c.h.b16 %v786
      %v917 = vunpack.c.l.b16 %v787
      %v918 = vunpack.c.h.b16 %v787
      %v919 = vunpack.c.l.b16 %v788
      %v920 = vunpack.c.h.b16 %v788
      %v921 = vpack.c.b16 %v855, %v853
      %v922 = vpack.c.b16 %v856, %v854
      %v923 = vpack.c.b16 %v859, %v857
      %v924 = vpack.c.b16 %v860, %v858
      %v925 = vpack.c.b16 %v863, %v861
      %v926 = vpack.c.b16 %v864, %v862
      %v927 = vpack.c.b16 %v867, %v865
      %v928 = vpack.c.b16 %v868, %v866
      %v929 = vpack.c.b16 %v871, %v869
      %v930 = vpack.c.b16 %v872, %v870
      %v931 = vpack.c.b16 %v875, %v873
      %v932 = vpack.c.b16 %v876, %v874
      %v933 = vpack.c.b16 %v879, %v877
      %v934 = vpack.c.b16 %v880, %v878
      %v935 = vpack.c.b16 %v883, %v881
      %v936 = vpack.c.b16 %v884, %v882
      %v937 = vpack.c.b16 %v887, %v885
      %v938 = vpack.c.b16 %v888, %v886
      %v939 = vpack.c.b16 %v891, %v889
      %v940 = vpack.c.b16 %v892, %v890
      %v941 = vpack.c.b16 %v895, %v893
      %v942 = vpack.c.b16 %v896, %v894
      %v943 = vpack.c.b16 %v899, %v897
      %v944 = vpack.c.b16 %v900, %v898
      %v945 = vpack.c.b16 %v903, %v901
      %v946 = vpack.c.b16 %v904, %v902
      %v947 = vpack.c.b16 %v907, %v905
      %v948 = vpack.c.b16 %v908, %v906
      %v949 = vpack.c.b16 %v911, %v909
      %v950 = vpack.c.b16 %v912, %v910
      %v951 = vpack.c.b16 %v915, %v913
      %v952 = vpack.c.b16 %v916, %v914
      %v953 = vpack.c.b16 %v919, %v917
      %v954 = vpack.c.b16 %v920, %v918
      %v988 = vsel %vm619, %v811, 0
      %v991 = vsel %vm619, %v814, 0
      %v994 = vsel %vm626, %v953, 0
      %v997 = vsel %vm626, %v954, 0
      %999 = vmatpush.bf16.msra.mxu0 %v935
      %1000 = vmatpush.bf16.msra.mxu0 %v933
      %1001 = vmatpush.bf16.msra.mxu0 %v931
      %1002 = vmatpush.bf16.msra.mxu0 %v929
      %1003 = vmatpush.bf16.msra.mxu0 %v927
      %1004 = vmatpush.bf16.msra.mxu0 %v925
      %1005 = vmatpush.bf16.msra.mxu0 %v923
      %1006 = vmatpush.bf16.msra.mxu0 %v921
      %1007 = vmatmul.bf16.gmra.mxu0 %v809
      %v1008 = vpop.f32.mrf.mxu0
      %v1009 = vadd.f32 %v681, %v1008
      %v1010 = vpop.f32.mrf.mxu0
      %v1011 = vadd.f32 %v683, %v1010
      %1012 = vmatmul.bf16.gmra.mxu0 %v812
      %v1013 = vpop.f32.mrf.mxu0
      %v1014 = vadd.f32 %v686, %v1013
      %v1015 = vpop.f32.mrf.mxu0
      %v1016 = vadd.f32 %v688, %v1015
      %1017 = vdwg.mxu0
      %1018 = vmatpush.bf16.msra.mxu0 %v951
      %1019 = vmatpush.bf16.msra.mxu0 %v949
      %1020 = vmatpush.bf16.msra.mxu0 %v947
      %1021 = vmatpush.bf16.msra.mxu0 %v945
      %1022 = vmatpush.bf16.msra.mxu0 %v943
      %1023 = vmatpush.bf16.msra.mxu0 %v941
      %1024 = vmatpush.bf16.msra.mxu0 %v939
      %1025 = vmatpush.bf16.msra.mxu0 %v937
      %1026 = vmatmul.bf16.gmra.mxu0 %v810
      %v1027 = vpop.f32.mrf.mxu0
      %v1028 = vadd.f32 %v1009, %v1027
      %v1029 = vpop.f32.mrf.mxu0
      %v1030 = vadd.f32 %v1011, %v1029
      %1031 = vmatmul.bf16.gmra.mxu0 %v813
      %v1032 = vpop.f32.mrf.mxu0
      %v1033 = vadd.f32 %v1014, %v1032
      %v1034 = vpop.f32.mrf.mxu0
      %v1035 = vadd.f32 %v1016, %v1034
      %1036 = vdwg.mxu0
      %1037 = vmatpush.bf16.msra.mxu0 0
      %1038 = vmatpush.bf16.msra.mxu0 0
      %1039 = vmatpush.bf16.msra.mxu0 0
      %1040 = vmatpush.bf16.msra.mxu0 0
      %1041 = vmatpush.bf16.msra.mxu0 0
      %1042 = vmatpush.bf16.msra.mxu0 0
      %1043 = vmatpush.bf16.msra.mxu0 0
      %1044 = vmatpush.bf16.msra.mxu0 %v994
      %1045 = vmatmul.bf16.gmra.mxu0 %v988
      %v1046 = vpop.f32.mrf.mxu0
      %v1047 = vadd.f32 %v1028, %v1046
      %v1048 = vpop.f32.mrf.mxu0
      %v1049 = vadd.f32 %v1030, %v1048
      %1050 = vmatmul.bf16.gmra.mxu0 %v991
      %v1051 = vpop.f32.mrf.mxu0
      %v1052 = vadd.f32 %v1033, %v1051
      %v1053 = vpop.f32.mrf.mxu0
      %v1054 = vadd.f32 %v1035, %v1053
      %1055 = vdwg.mxu0
      %1056 = vmatpush.bf16.msra.mxu0 %v936
      %1057 = vmatpush.bf16.msra.mxu0 %v934
      %1058 = vmatpush.bf16.msra.mxu0 %v932
      %1059 = vmatpush.bf16.msra.mxu0 %v930
      %1060 = vmatpush.bf16.msra.mxu0 %v928
      %1061 = vmatpush.bf16.msra.mxu0 %v926
      %1062 = vmatpush.bf16.msra.mxu0 %v924
      %1063 = vmatpush.bf16.msra.mxu0 %v922
      %1064 = vmatmul.bf16.gmra.mxu0 %v809
      %v1065 = vpop.f32.mrf.mxu0
      %v1066 = vadd.f32 %v738, %v1065
      %v1067 = vpop.f32.mrf.mxu0
      %v1068 = vadd.f32 %v740, %v1067
      %1069 = vmatmul.bf16.gmra.mxu0 %v812
      %v1070 = vpop.f32.mrf.mxu0
      %v1071 = vadd.f32 %v743, %v1070
      %v1072 = vpop.f32.mrf.mxu0
      %v1073 = vadd.f32 %v745, %v1072
      %1074 = vdwg.mxu0
      %1075 = vmatpush.bf16.msra.mxu0 %v952
      %1076 = vmatpush.bf16.msra.mxu0 %v950
      %1077 = vmatpush.bf16.msra.mxu0 %v948
      %1078 = vmatpush.bf16.msra.mxu0 %v946
      %1079 = vmatpush.bf16.msra.mxu0 %v944
      %1080 = vmatpush.bf16.msra.mxu0 %v942
      %1081 = vmatpush.bf16.msra.mxu0 %v940
      %1082 = vmatpush.bf16.msra.mxu0 %v938
      %1083 = vmatmul.bf16.gmra.mxu0 %v810
      %v1084 = vpop.f32.mrf.mxu0
      %v1085 = vadd.f32 %v1066, %v1084
      %v1086 = vpop.f32.mrf.mxu0
      %v1087 = vadd.f32 %v1068, %v1086
      %1088 = vmatmul.bf16.gmra.mxu0 %v813
      %v1089 = vpop.f32.mrf.mxu0
      %v1090 = vadd.f32 %v1071, %v1089
      %v1091 = vpop.f32.mrf.mxu0
      %v1092 = vadd.f32 %v1073, %v1091
      %1093 = vdwg.mxu0
      %1094 = vmatpush.bf16.msra.mxu0 0
      %1095 = vmatpush.bf16.msra.mxu0 0
      %1096 = vmatpush.bf16.msra.mxu0 0
      %1097 = vmatpush.bf16.msra.mxu0 0
      %1098 = vmatpush.bf16.msra.mxu0 0
      %1099 = vmatpush.bf16.msra.mxu0 0
      %1100 = vmatpush.bf16.msra.mxu0 0
      %1101 = vmatpush.bf16.msra.mxu0 %v997
      %1102 = vmatmul.bf16.gmra.mxu0 %v988
      %v1103 = vpop.f32.mrf.mxu0
      %v1104 = vadd.f32 %v1085, %v1103
      %v1105 = vpop.f32.mrf.mxu0
      %v1106 = vadd.f32 %v1087, %v1105
      %1107 = vmatmul.bf16.gmra.mxu0 %v991
      %v1108 = vpop.f32.mrf.mxu0
      %v1109 = vadd.f32 %v1090, %v1108
      %v1110 = vpop.f32.mrf.mxu0
      %v1111 = vadd.f32 %v1092, %v1110
      %1112 = vdwg.mxu0
      %v1113 = vld [vmem:[%s4] sm:$0xff]
      %v1114 = vld [vmem:[%s4 + $0x8] sm:$0xff]
      %v1115 = vld [vmem:[%s4 + $0x10] sm:$0xff]
      %v1116 = vld [vmem:[%s4 + $0x18] sm:$0x3f]
      %1118 = vset.pattern.permute.xlu0 0
      %1119 = vperm.xlu0 %1118, %v1113
      %v1120 = vpop.permute.xlu0 %1119
      %1123 = vset.pattern.permute.xlu0 0
      %1124 = vperm.xlu0 %1123, %v1114
      %v1125 = vpop.permute.xlu0 %1124
      %1128 = vset.pattern.permute.xlu0 0
      %1129 = vperm.xlu0 %1128, %v1115
      %v1130 = vpop.permute.xlu0 %1129
      %1133 = vset.pattern.permute.xlu0 0
      %1134 = vperm.xlu0 %1133, %v1116
      %v1135 = vpop.permute.xlu0 %1134
      %v1137 = vadd.f32 %v1047, %v1120
      %v1138 = vadd.f32 %v1104, %v1120
      %v1139 = vadd.f32 %v1049, %v1125
      %v1140 = vadd.f32 %v1106, %v1125
      %v1141 = vadd.f32 %v1052, %v1130
      %v1142 = vadd.f32 %v1109, %v1130
      %v1143 = vadd.f32 %v1054, %v1135
      %v1144 = vadd.f32 %v1111, %v1135
      %vm1145 = vcmp.ge.f32.partialorder %v1137, 0.0
      %vm1146 = vcmp.ge.f32.partialorder %v1138, 0.0
      %vm1147 = vcmp.ge.f32.partialorder %v1139, 0.0
      %vm1148 = vcmp.ge.f32.partialorder %v1140, 0.0
      %vm1149 = vcmp.ge.f32.partialorder %v1141, 0.0
      %vm1150 = vcmp.ge.f32.partialorder %v1142, 0.0
      %vm1151 = vcmp.ge.f32.partialorder %v1143, 0.0
      %vm1152 = vcmp.ge.f32.partialorder %v1144, 0.0
      %v1153 = vld [vmem:[%s5] sm:$0xff]
      %v1154 = vld [vmem:[%s5 + $0x8] sm:$0xff]
      %v1155 = vld [vmem:[%s5 + $0x10] sm:$0xff]
      %v1156 = vld [vmem:[%s5 + $0x18] sm:$0x3f]
      %1158 = vset.pattern.permute.xlu0 0
      %1159 = vperm.xlu0 %1158, %v1153
      %v1160 = vpop.permute.xlu0 %1159
      %1163 = vset.pattern.permute.xlu0 0
      %1164 = vperm.xlu0 %1163, %v1154
      %v1165 = vpop.permute.xlu0 %1164
      %1168 = vset.pattern.permute.xlu0 0
      %1169 = vperm.xlu0 %1168, %v1155
      %v1170 = vpop.permute.xlu0 %1169
      %1173 = vset.pattern.permute.xlu0 0
      %1174 = vperm.xlu0 %1173, %v1156
      %v1175 = vpop.permute.xlu0 %1174
      %v1177 = vmul.f32 %v1160, %v1137
      %v1178 = vmul.f32 %v1160, %v1138
      %v1179 = vmul.f32 %v1165, %v1139
      %v1180 = vmul.f32 %v1165, %v1140
      %v1181 = vmul.f32 %v1170, %v1141
      %v1182 = vmul.f32 %v1170, %v1142
      %v1183 = vmul.f32 %v1175, %v1143
      %v1184 = vmul.f32 %v1175, %v1144
      %v1185 = vsel %vm1145, %v1137, %v1177
      %v1186 = vsel %vm1146, %v1138, %v1178
      %v1187 = vsel %vm1147, %v1139, %v1179
      %v1188 = vsel %vm1148, %v1140, %v1180
      %v1189 = vsel %vm1149, %v1141, %v1181
      %v1190 = vsel %vm1150, %v1142, %v1182
      %v1191 = vsel %vm1151, %v1143, %v1183
      %v1192 = vsel %vm1152, %v1144, %v1184
      %1193 = vst [vmem:[%s366] sm:$0xff] %v1185
      %1194 = vst [vmem:[%s366 + $0x8] sm:$0xff] %v1186
      %1195 = vst [vmem:[%s366 + $0x10] sm:$0xff] %v1187
      %1196 = vst [vmem:[%s366 + $0x18] sm:$0xff] %v1188
      %1197 = vst [vmem:[%s366 + $0x20] sm:$0xff] %v1189
      %1198 = vst [vmem:[%s366 + $0x28] sm:$0xff] %v1190
      %1199 = vst [vmem:[%s366 + $0x30] sm:$0x3f] %v1191
      %1200 = vst [vmem:[%s366 + $0x38] sm:$0x3f] %v1192
      %1201 = vst [vmem:[%s376] sm:$0xff] %v681
      %1202 = vst [vmem:[%s376 + $0x8] sm:$0xff] %v738
      %1203 = vst [vmem:[%s376 + $0x10] sm:$0xff] %v683
      %1204 = vst [vmem:[%s376 + $0x18] sm:$0xff] %v740
      %1205 = vst [vmem:[%s376 + $0x20] sm:$0xff] %v686
      %1206 = vst [vmem:[%s376 + $0x28] sm:$0xff] %v743
      %1207 = vst [vmem:[%s376 + $0x30] sm:$0x3f] %v688
      %1208 = vst [vmem:[%s376 + $0x38] sm:$0x3f] %v745
      %s1209 = smul.u32 2, %s24
      %p1210 = scmp.lt.s32.totalorder %s23, 1
      %s1211 = scalar_select %p1210, %s23, 1
      %p1212 = scmp.lt.s32.totalorder %s1209, 1
      %s1213 = scalar_select %p1212, %s1209, 1
      %s1214 = smul.addr %s1211, 8
      %s1215 = sadd.s32 %s1213, %s1214
      %s1216 = smul.addr %s1215, 8
      %s1217 = scalar_lea.vmem %s6, %s1216
      %s1218 = smul.u32 2, %s24
      %p1219 = scmp.lt.s32.totalorder %s23, 1
      %s1220 = scalar_select %p1219, %s23, 1
      %p1221 = scmp.lt.s32.totalorder %s1218, 1
      %s1222 = scalar_select %p1221, %s1218, 1
      %s1223 = smul.addr %s1220, 8
      %s1224 = sadd.s32 %s1222, %s1223
      %s1225 = smul.addr %s1224, 8
      %s1226 = scalar_lea.vmem %s7, %s1225
      // Predicated region
      $region45: #{_lambda_.4} parent=43 // pred_check
        %p1227 = pneg %p191
      $region46: #{_lambda_.4} parent=43 // pred_check_branch
        %1229 = sbr.rel (%p1227) target = $region48
      $region47: #{_lambda_.4} parent=43 // pred_region
        %s1230 = smul.u32 2, %s24
      $region48: #{_lambda_.4} parent=43 // pred_fallthru
        _
      // Predicated region
      $region49: #{_lambda_.4} parent=43 // pred_check
        %p1231 = pneg %p219
      $region50: #{_lambda_.4} parent=43 // pred_check_branch
        %1233 = sbr.rel (%p1231) target = $region52
      $region51: #{_lambda_.4} parent=43 // pred_region
        %s1234 = smul.u32 2, %s24
      $region52: #{_lambda_.4} parent=43 // pred_fallthru
        _
    $region44: #{_lambda_.4} parent=5 // pred_fallthru
      _
    %p1235 = scmp.le.s32.totalorder 2, %s14
    // Predicated region
    $region53: #{_lambda_.4} parent=5 // pred_check
      %p1236 = pneg %p1235
    $region54: #{_lambda_.4} parent=5 // pred_check_branch
      %1238 = sbr.rel (%p1236) target = $region56
    $region55: #{_lambda_.4} parent=5 // pred_region
      %s1239 = ssub.s32 %s14, 2
      // Predicated region
      $region57: #{_lambda_.4} parent=55 // pred_check
        %p1240 = pneg %p197
      $region58: #{_lambda_.4} parent=55 // pred_check_branch
        %1242 = sbr.rel (%p1240) target = $region60
      $region59: #{_lambda_.4} parent=55 // pred_region
        %s1243 = smul.u32 2, %s26
        %p1244 = scmp.lt.s32.totalorder %s25, 1
        %s1245 = scalar_select %p1244, %s25, 1
        %p1246 = scmp.lt.s32.totalorder %s1243, 1
        %s1247 = scalar_select %p1246, %s1243, 1
        %s1248 = smul.addr %s1245, 8
        %s1249 = sadd.s32 %s1247, %s1248
        %s1250 = smul.addr %s1249, 8
        %s1251 = scalar_lea.vmem %s6, %s1250
      $region60: #{_lambda_.4} parent=55 // pred_fallthru
        _
      // Predicated region
      $region61: #{_lambda_.4} parent=55 // pred_check
        %p1252 = pneg %p225
      $region62: #{_lambda_.4} parent=55 // pred_check_branch
        %1254 = sbr.rel (%p1252) target = $region64
      $region63: #{_lambda_.4} parent=55 // pred_region
        %s1255 = smul.u32 2, %s26
        %p1256 = scmp.lt.s32.totalorder %s25, 1
        %s1257 = scalar_select %p1256, %s25, 1
        %p1258 = scmp.lt.s32.totalorder %s1255, 1
        %s1259 = scalar_select %p1258, %s1255, 1
        %s1260 = smul.addr %s1257, 8
        %s1261 = sadd.s32 %s1259, %s1260
        %s1262 = smul.addr %s1261, 8
        %s1263 = scalar_lea.vmem %s7, %s1262
      $region64: #{_lambda_.4} parent=55 // pred_fallthru
        _
    $region56: #{_lambda_.4} parent=5 // pred_fallthru
      _
  $region6: #{_lambda_.4} parent=0 // loop_footer
    %s18 = sadd.s32 1, %s14
  $region7: #{_lambda_.4} parent=0 // loop_footer_branch
    %13 = sbr.rel target = $region3
  $region8: #{_lambda_.4} parent=0 // loop_exit
    _

// kernel: _lambda_.5
$region0: #{_lambda_.5}
  #allocation0 [shape = 'u32[]', space=smem, size = 0x4, offset = 0x4, fixed_abs, tag = 'smem constant byte address 0x4 - core index']
  #allocation1 [shape = 'u32[72,128]{1,0:T(1,128)}', space=vmem, size = 0x9000, scoped, tag = 'internal scratch']
  %s0 = inlined_call_operand.vmem [shape: bf16[2,270,256], index: 0, kind: input, shape index: {}]
  %s1 = inlined_call_operand.vmem [shape: bf16[30,270], index: 1, kind: input, shape index: {}]
  %s2 = inlined_call_operand.vmem [shape: f32[2,30,256], index: 2, kind: input, shape index: {}]
  %s3 = inlined_call_operand.vmem [shape: f32[30,1], index: 3, kind: input, shape index: {}]
  %s4 = inlined_call_operand.vmem [shape: f32[30,1], index: 4, kind: input, shape index: {}]
  %s5 = inlined_call_operand.vmem [shape: f32[2,30,256], index: 5, kind: input, shape index: {}]
  %s6 = inlined_call_operand.vmem [shape: f32[2,2,30,256], index: 6, kind: output, shape index: {}]
  %s7 = sld [smem:[#allocation0]]
  $region57: #{_lambda_.5} parent=0
    _
  %s9 = ssub.s32 1, %s7
  %s10 = scalar_select 0, %s9, %s7
  loop: start=0, step=1, limit=4
  $region2: #{_lambda_.5} parent=0 // loop_pre_header
    _
  $region3: #{_lambda_.5} parent=0 // loop_header
    %s12 = sphi 0, %s16
    %p13 = scmp.ge.s32.totalorder %s12, 4
    %s19 = sphi 0, %s31
    %s20 = sphi 0, %s27
    %s21 = sphi 0, %s19
    %s22 = sphi 0, %s20
    %s23 = sphi 0, %s21
    %s24 = sphi 0, %s22
    %s36 = sphi 0, %s38
    %s39 = sphi 0, %s36
    %s40 = sphi 0, %s39
    %s56 = sphi 0, %s40
    %s60 = sphi 0, %s60
    %s62 = sphi 0, %s60
    %s63 = sphi 0, %s62
    %s77 = sphi 0, %s63
    %s85 = sphi 0, %s87
    %s88 = sphi 0, %s85
    %s89 = sphi 0, %s88
    %s105 = sphi 0, %s89
    %s109 = sphi 0, %s109
    %s111 = sphi 0, %s109
    %s112 = sphi 0, %s111
    %s126 = sphi 0, %s112
    %s130 = sphi 0, %s130
    %s132 = sphi 0, %s130
    %s133 = sphi 0, %s132
    %s147 = sphi 0, %s133
    %s155 = sphi 0, %s157
    %s158 = sphi 0, %s155
    %s159 = sphi 0, %s158
    %s175 = sphi 0, %s159
    %s183 = sphi 0, %s185
    %s186 = sphi 0, %s183
    %s187 = sphi 0, %s186
    %s203 = sphi 0, %s187
  $region4: #{_lambda_.5} parent=0 // loop_header_branch
    %15 = sbr.rel (%p13) target = $region8
  $region5: #{_lambda_.5} parent=0 // loop_body
    %s17 = ssub.s32 %s12, 1
    %s18 = ssub.s32 %s12, 2
    %s25 = sadd.s32 1, %s20
    %p26 = scmp.ge.s32.totalorder %s25, 1
    %s27 = scalar_select %p26, 0, %s25
    %s28 = sadd.s32 1, %s19
    %s29 = scalar_select %p26, %s28, %s19
    %p30 = scmp.ge.s32.totalorder %s29, 2
    %s31 = scalar_select %p30, 0, %s29
    %s32 = ssub.s32 %s19, %s31
    %s33 = ssub.s32 %s20, %s27
    %s34 = sor.u32 %s32, %s33
    %p35 = scmp.eq.s32.totalorder %s34, 0
    %s37 = sadd.s32 %s36, 1
    %s38 = scalar_select %p35, %s36, %s37
    %p41 = pneg %p35
    %p42 = scmp.eq.s32.totalorder %s12, 1
    %p43 = por %p41, %p42
    %p44 = scmp.ne.s32.totalorder %s36, %s39
    %p45 = scmp.eq.s32.totalorder %s12, 0
    %p46 = por %p44, %p45
    %p47 = scmp.ne.s32.totalorder %s36, %s39
    %p48 = scmp.eq.s32.totalorder %s17, 1
    %p49 = por %p47, %p48
    %p50 = scmp.ne.s32.totalorder %s39, %s40
    %p51 = scmp.eq.s32.totalorder %s17, 0
    %p52 = por %p50, %p51
    %p53 = scmp.ne.s32.totalorder %s39, %s40
    %p54 = scmp.eq.s32.totalorder %s18, 1
    %p55 = por %p53, %p54
    %p57 = scmp.ne.s32.totalorder %s40, %s56
    %p58 = scmp.eq.s32.totalorder %s18, 0
    %p59 = por %p57, %p58
    %s61 = sadd.s32 %s60, 1
    %p64 = scmp.eq.s32.totalorder %s12, 1
    %p65 = scmp.ne.s32.totalorder %s60, %s62
    %p66 = scmp.eq.s32.totalorder %s12, 0
    %p67 = por %p65, %p66
    %p68 = scmp.ne.s32.totalorder %s60, %s62
    %p69 = scmp.eq.s32.totalorder %s17, 1
    %p70 = por %p68, %p69
    %p71 = scmp.ne.s32.totalorder %s62, %s63
    %p72 = scmp.eq.s32.totalorder %s17, 0
    %p73 = por %p71, %p72
    %p74 = scmp.ne.s32.totalorder %s62, %s63
    %p75 = scmp.eq.s32.totalorder %s18, 1
    %p76 = por %p74, %p75
    %p78 = scmp.ne.s32.totalorder %s63, %s77
    %p79 = scmp.eq.s32.totalorder %s18, 0
    %p80 = por %p78, %p79
    %s81 = ssub.s32 %s19, %s31
    %s82 = ssub.s32 %s20, %s27
    %s83 = sor.u32 %s81, %s82
    %p84 = scmp.eq.s32.totalorder %s83, 0
    %s86 = sadd.s32 %s85, 1
    %s87 = scalar_select %p84, %s85, %s86
    %p90 = pneg %p84
    %p91 = scmp.eq.s32.totalorder %s12, 1
    %p92 = por %p90, %p91
    %p93 = scmp.ne.s32.totalorder %s85, %s88
    %p94 = scmp.eq.s32.totalorder %s12, 0
    %p95 = por %p93, %p94
    %p96 = scmp.ne.s32.totalorder %s85, %s88
    %p97 = scmp.eq.s32.totalorder %s17, 1
    %p98 = por %p96, %p97
    %p99 = scmp.ne.s32.totalorder %s88, %s89
    %p100 = scmp.eq.s32.totalorder %s17, 0
    %p101 = por %p99, %p100
    %p102 = scmp.ne.s32.totalorder %s88, %s89
    %p103 = scmp.eq.s32.totalorder %s18, 1
    %p104 = por %p102, %p103
    %p106 = scmp.ne.s32.totalorder %s89, %s105
    %p107 = scmp.eq.s32.totalorder %s18, 0
    %p108 = por %p106, %p107
    %s110 = sadd.s32 %s109, 1
    %p113 = scmp.eq.s32.totalorder %s12, 1
    %p114 = scmp.ne.s32.totalorder %s109, %s111
    %p115 = scmp.eq.s32.totalorder %s12, 0
    %p116 = por %p114, %p115
    %p117 = scmp.ne.s32.totalorder %s109, %s111
    %p118 = scmp.eq.s32.totalorder %s17, 1
    %p119 = por %p117, %p118
    %p120 = scmp.ne.s32.totalorder %s111, %s112
    %p121 = scmp.eq.s32.totalorder %s17, 0
    %p122 = por %p120, %p121
    %p123 = scmp.ne.s32.totalorder %s111, %s112
    %p124 = scmp.eq.s32.totalorder %s18, 1
    %p125 = por %p123, %p124
    %p127 = scmp.ne.s32.totalorder %s112, %s126
    %p128 = scmp.eq.s32.totalorder %s18, 0
    %p129 = por %p127, %p128
    %s131 = sadd.s32 %s130, 1
    %p134 = scmp.eq.s32.totalorder %s12, 1
    %p135 = scmp.ne.s32.totalorder %s130, %s132
    %p136 = scmp.eq.s32.totalorder %s12, 0
    %p137 = por %p135, %p136
    %p138 = scmp.ne.s32.totalorder %s130, %s132
    %p139 = scmp.eq.s32.totalorder %s17, 1
    %p140 = por %p138, %p139
    %p141 = scmp.ne.s32.totalorder %s132, %s133
    %p142 = scmp.eq.s32.totalorder %s17, 0
    %p143 = por %p141, %p142
    %p144 = scmp.ne.s32.totalorder %s132, %s133
    %p145 = scmp.eq.s32.totalorder %s18, 1
    %p146 = por %p144, %p145
    %p148 = scmp.ne.s32.totalorder %s133, %s147
    %p149 = scmp.eq.s32.totalorder %s18, 0
    %p150 = por %p148, %p149
    %s151 = ssub.s32 %s19, %s31
    %s152 = ssub.s32 %s20, %s27
    %s153 = sor.u32 %s151, %s152
    %p154 = scmp.eq.s32.totalorder %s153, 0
    %s156 = sadd.s32 %s155, 1
    %s157 = scalar_select %p154, %s155, %s156
    %p160 = pneg %p154
    %p161 = scmp.eq.s32.totalorder %s12, 1
    %p162 = por %p160, %p161
    %p163 = scmp.ne.s32.totalorder %s155, %s158
    %p164 = scmp.eq.s32.totalorder %s12, 0
    %p165 = por %p163, %p164
    %p166 = scmp.ne.s32.totalorder %s155, %s158
    %p167 = scmp.eq.s32.totalorder %s17, 1
    %p168 = por %p166, %p167
    %p169 = scmp.ne.s32.totalorder %s158, %s159
    %p170 = scmp.eq.s32.totalorder %s17, 0
    %p171 = por %p169, %p170
    %p172 = scmp.ne.s32.totalorder %s158, %s159
    %p173 = scmp.eq.s32.totalorder %s18, 1
    %p174 = por %p172, %p173
    %p176 = scmp.ne.s32.totalorder %s159, %s175
    %p177 = scmp.eq.s32.totalorder %s18, 0
    %p178 = por %p176, %p177
    %s179 = ssub.s32 %s19, %s31
    %s180 = ssub.s32 %s20, %s27
    %s181 = sor.u32 %s179, %s180
    %p182 = scmp.eq.s32.totalorder %s181, 0
    %s184 = sadd.s32 %s183, 1
    %s185 = scalar_select %p182, %s183, %s184
    %p188 = pneg %p182
    %p189 = scmp.eq.s32.totalorder %s12, 1
    %p190 = por %p188, %p189
    %p191 = scmp.ne.s32.totalorder %s183, %s186
    %p192 = scmp.eq.s32.totalorder %s12, 0
    %p193 = por %p191, %p192
    %p194 = scmp.ne.s32.totalorder %s183, %s186
    %p195 = scmp.eq.s32.totalorder %s17, 1
    %p196 = por %p194, %p195
    %p197 = scmp.ne.s32.totalorder %s186, %s187
    %p198 = scmp.eq.s32.totalorder %s17, 0
    %p199 = por %p197, %p198
    %p200 = scmp.ne.s32.totalorder %s186, %s187
    %p201 = scmp.eq.s32.totalorder %s18, 1
    %p202 = por %p200, %p201
    %p204 = scmp.ne.s32.totalorder %s187, %s203
    %p205 = scmp.eq.s32.totalorder %s18, 0
    %p206 = por %p204, %p205
    %p207 = scmp.le.s32.totalorder 1, %s12
    %p208 = scmp.lt.s32.totalorder %s12, 3
    %p209 = pnand %p207, %p208
    %p210 = pneg %p209
    // Predicated region
    $region9: #{_lambda_.5} parent=5 // pred_check
      _
    $region10: #{_lambda_.5} parent=5 // pred_check_branch
      %212 = sbr.rel (%p209) target = $region12
    $region11: #{_lambda_.5} parent=5 // pred_region
      %s213 = ssub.s32 %s12, 1
      // Predicated region
      $region13: #{_lambda_.5} parent=11 // pred_check
        %p214 = pneg %p73
      $region14: #{_lambda_.5} parent=11 // pred_check_branch
        %216 = sbr.rel (%p214) target = $region16
      $region15: #{_lambda_.5} parent=11 // pred_region
        _
      $region16: #{_lambda_.5} parent=11 // pred_fallthru
        _
      // Predicated region
      $region17: #{_lambda_.5} parent=11 // pred_check
        %p217 = pneg %p122
      $region18: #{_lambda_.5} parent=11 // pred_check_branch
        %219 = sbr.rel (%p217) target = $region20
      $region19: #{_lambda_.5} parent=11 // pred_region
        _
      $region20: #{_lambda_.5} parent=11 // pred_fallthru
        _
      // Predicated region
      $region21: #{_lambda_.5} parent=11 // pred_check
        %p220 = pneg %p143
      $region22: #{_lambda_.5} parent=11 // pred_check_branch
        %222 = sbr.rel (%p220) target = $region24
      $region23: #{_lambda_.5} parent=11 // pred_region
        _
      $region24: #{_lambda_.5} parent=11 // pred_fallthru
        _
    $region12: #{_lambda_.5} parent=5 // pred_fallthru
      _
    %p223 = scmp.lt.s32.totalorder %s12, 2
    // Predicated region
    $region25: #{_lambda_.5} parent=5 // pred_check
      %p224 = pneg %p223
    $region26: #{_lambda_.5} parent=5 // pred_check_branch
      %226 = sbr.rel (%p224) target = $region28
    $region27: #{_lambda_.5} parent=5 // pred_region
      // Predicated region
      $region29: #{_lambda_.5} parent=27 // pred_check
        %p227 = pneg %p46
      $region30: #{_lambda_.5} parent=27 // pred_check_branch
        %229 = sbr.rel (%p227) target = $region32
      $region31: #{_lambda_.5} parent=27 // pred_region
        %s230 = smul.u32 2, %s20
        %p231 = scmp.lt.s32.totalorder %s19, 1
        %s232 = scalar_select %p231, %s19, 1
        %p233 = scmp.lt.s32.totalorder %s230, 1
        %s234 = scalar_select %p233, %s230, 1
        %s235 = smul.addr %s232, 68
        %s236 = sadd.s32 %s234, %s235
        %s237 = smul.addr %s236, 4
        %s238 = scalar_lea.vmem %s0, %s237
        %s239 = smul.u32 2, %s20
      $region32: #{_lambda_.5} parent=27 // pred_fallthru
        _
      // Predicated region
      $region33: #{_lambda_.5} parent=27 // pred_check
        %p240 = pneg %p95
      $region34: #{_lambda_.5} parent=27 // pred_check_branch
        %242 = sbr.rel (%p240) target = $region36
      $region35: #{_lambda_.5} parent=27 // pred_region
        %s243 = smul.u32 2, %s20
        %p244 = scmp.lt.s32.totalorder %s19, 1
        %s245 = scalar_select %p244, %s19, 1
        %p246 = scmp.lt.s32.totalorder %s243, 1
        %s247 = scalar_select %p246, %s243, 1
        %s248 = smul.addr %s245, 8
        %s249 = sadd.s32 %s247, %s248
        %s250 = smul.addr %s249, 8
        %s251 = scalar_lea.vmem %s2, %s250
        %s252 = smul.u32 2, %s20
      $region36: #{_lambda_.5} parent=27 // pred_fallthru
        _
      // Predicated region
      $region37: #{_lambda_.5} parent=27 // pred_check
        %p253 = pneg %p165
      $region38: #{_lambda_.5} parent=27 // pred_check_branch
        %255 = sbr.rel (%p253) target = $region40
      $region39: #{_lambda_.5} parent=27 // pred_region
        %s256 = smul.u32 2, %s20
        %p257 = scmp.lt.s32.totalorder %s19, 1
        %s258 = scalar_select %p257, %s19, 1
        %p259 = scmp.lt.s32.totalorder %s256, 1
        %s260 = scalar_select %p259, %s256, 1
        %s261 = smul.addr %s258, 8
        %s262 = sadd.s32 %s260, %s261
        %s263 = smul.addr %s262, 8
        %s264 = scalar_lea.vmem %s5, %s263
        %s265 = smul.u32 2, %s20
      $region40: #{_lambda_.5} parent=27 // pred_fallthru
        _
    $region28: #{_lambda_.5} parent=5 // pred_fallthru
      _
    %p266 = scmp.le.s32.totalorder 1, %s12
    %p267 = scmp.lt.s32.totalorder %s12, 3
    %p268 = pnand %p266, %p267
    %p269 = pneg %p268
    // Predicated region
    $region41: #{_lambda_.5} parent=5 // pred_check
      _
    $region42: #{_lambda_.5} parent=5 // pred_check_branch
      %271 = sbr.rel (%p268) target = $region44
    $region43: #{_lambda_.5} parent=5 // pred_region
      %s272 = ssub.s32 %s12, 1
      %s273 = smul.u32 2, %s22
      %p274 = scmp.lt.s32.totalorder %s21, 1
      %s275 = scalar_select %p274, %s21, 1
      %p276 = scmp.lt.s32.totalorder %s273, 1
      %s277 = scalar_select %p276, %s273, 1
      %s278 = smul.addr %s275, 68
      %s279 = sadd.s32 %s277, %s278
      %s280 = smul.addr %s279, 4
      %s281 = scalar_lea.vmem %s0, %s280
      %p282 = pneg %p52
      %p283 = pneg %p49
      %p284 = pneg %p73
      %p285 = pneg %p70
      %s286 = smul.u32 2, %s22
      %p287 = scmp.lt.s32.totalorder %s21, 1
      %s288 = scalar_select %p287, %s21, 1
      %p289 = scmp.lt.s32.totalorder %s286, 1
      %s290 = scalar_select %p289, %s286, 1
      %s291 = smul.addr %s288, 8
      %s292 = sadd.s32 %s290, %s291
      %s293 = smul.addr %s292, 8
      %s294 = scalar_lea.vmem %s2, %s293
      %p295 = pneg %p101
      %p296 = pneg %p98
      %p297 = pneg %p122
      %p298 = pneg %p119
      %p299 = pneg %p143
      %p300 = pneg %p140
      %s301 = smul.u32 2, %s22
      %p302 = scmp.lt.s32.totalorder %s21, 1
      %s303 = scalar_select %p302, %s21, 1
      %p304 = scmp.lt.s32.totalorder %s301, 1
      %s305 = scalar_select %p304, %s301, 1
      %s306 = smul.addr %s303, 8
      %s307 = sadd.s32 %s305, %s306
      %s308 = smul.addr %s307, 8
      %s309 = scalar_lea.vmem %s5, %s308
      %p310 = pneg %p171
      %p311 = pneg %p168
      %p312 = pneg %p199
      %p313 = pneg %p196
      %s314 = smul.u32 2, %s22
      %p315 = scmp.lt.s32.totalorder %s21, 1
      %s316 = scalar_select %p315, %s21, 1
      %p317 = scmp.lt.s32.totalorder %s314, 1
      %s318 = scalar_select %p317, %s314, 1
      %s319 = smul.addr %s316, 16
      %s320 = sadd.s32 %s318, %s319
      %s321 = smul.addr %s320, 8
      %s322 = scalar_lea.vmem %s6, %s321
      %s323 = smul.u32 2, %s22
      %p324 = scmp.lt.s32.totalorder %s21, 1
      %s325 = scalar_select %p324, %s21, 1
      %p326 = scmp.lt.s32.totalorder %s323, 1
      %s327 = scalar_select %p326, %s323, 1
      %s328 = smul.addr %s325, 68
      %s329 = sadd.s32 %s327, %s328
      %s330 = smul.addr %s329, 4
      %s331 = scalar_lea.vmem %s0, %s330
      %s332 = smul.u32 2, %s22
      %s333 = smul.u32 2, %s22
      %p334 = scmp.lt.s32.totalorder %s21, 1
      %s335 = scalar_select %p334, %s21, 1
      %p336 = scmp.lt.s32.totalorder %s333, 1
      %s337 = scalar_select %p336, %s333, 1
      %s338 = smul.addr %s335, 8
      %s339 = sadd.s32 %s337, %s338
      %s340 = smul.addr %s339, 8
      %s341 = scalar_lea.vmem %s2, %s340
      %s342 = smul.u32 2, %s22
      %s343 = smul.u32 2, %s22
      %p344 = scmp.lt.s32.totalorder %s21, 1
      %s345 = scalar_select %p344, %s21, 1
      %p346 = scmp.lt.s32.totalorder %s343, 1
      %s347 = scalar_select %p346, %s343, 1
      %s348 = smul.addr %s345, 8
      %s349 = sadd.s32 %s347, %s348
      %s350 = smul.addr %s349, 8
      %s351 = scalar_lea.vmem %s5, %s350
      %s352 = smul.u32 2, %s22
      %s353 = smul.u32 2, %s22
      %p354 = scmp.lt.s32.totalorder %s21, 1
      %s355 = scalar_select %p354, %s21, 1
      %p356 = scmp.lt.s32.totalorder %s353, 1
      %s357 = scalar_select %p356, %s353, 1
      %s358 = smul.addr %s355, 16
      %s359 = sadd.s32 %s357, %s358
      %s360 = smul.addr %s359, 8
      %s361 = scalar_lea.vmem %s6, %s360
      %s362 = smul.u32 2, %s22
      %v364 = vld [vmem:[%s1] sm:$0xff]
      %v365 = vld [vmem:[%s1 + $0x8] sm:$0xf]
      %v366 = vld [vmem:[%s1 + $0xc] sm:$0xff]
      %v367 = vld [vmem:[%s1 + $0x14] sm:$0xf]
      %v368 = vld [vmem:[%s1 + $0x18] sm:$0xff]
      %v369 = vld [vmem:[%s1 + $0x20] sm:$0xf]
      %v370 = vld [vmem:[%s1 + $0x24] sm:$0x77]
      %v371 = vld [vmem:[%s1 + $0x2c] sm:$0x7]
      %v372 = vld [vmem:[%s331] sm:$0xff]
      %v373 = vld [vmem:[%s331 + $0x8] sm:$0xff]
      %v374 = vld [vmem:[%s331 + $0x10] sm:$0xff]
      %v375 = vld [vmem:[%s331 + $0x18] sm:$0xff]
      %v376 = vld [vmem:[%s331 + $0x20] sm:$0xff]
      %v377 = vld [vmem:[%s331 + $0x28] sm:$0xff]
      %v378 = vld [vmem:[%s331 + $0x30] sm:$0xff]
      %v379 = vld [vmem:[%s331 + $0x38] sm:$0xff]
      %v380 = vld [vmem:[%s331 + $0x40] sm:$0xff]
      %v381 = vld [vmem:[%s331 + $0x48] sm:$0xff]
      %v382 = vld [vmem:[%s331 + $0x50] sm:$0xff]
      %v383 = vld [vmem:[%s331 + $0x58] sm:$0xff]
      %v384 = vld [vmem:[%s331 + $0x60] sm:$0xff]
      %v385 = vld [vmem:[%s331 + $0x68] sm:$0xff]
      %v386 = vld [vmem:[%s331 + $0x70] sm:$0xff]
      %v387 = vld [vmem:[%s331 + $0x78] sm:$0xff]
      %v388 = vld [vmem:[%s331 + $0x80] sm:$0xff]
      %v389 = vld [vmem:[%s331 + $0x88] sm:$0xff]
      %v390 = vld [vmem:[%s331 + $0x90] sm:$0xff]
      %v391 = vld [vmem:[%s331 + $0x98] sm:$0xff]
      %v392 = vld [vmem:[%s331 + $0xa0] sm:$0xff]
      %v393 = vld [vmem:[%s331 + $0xa8] sm:$0xff]
      %v394 = vld [vmem:[%s331 + $0xb0] sm:$0xff]
      %v395 = vld [vmem:[%s331 + $0xb8] sm:$0xff]
      %v396 = vld [vmem:[%s331 + $0xc0] sm:$0xff]
      %v397 = vld [vmem:[%s331 + $0xc8] sm:$0xff]
      %v398 = vld [vmem:[%s331 + $0xd0] sm:$0xff]
      %v399 = vld [vmem:[%s331 + $0xd8] sm:$0xff]
      %v400 = vld [vmem:[%s331 + $0xe0] sm:$0xff]
      %v401 = vld [vmem:[%s331 + $0xe8] sm:$0xff]
      %v402 = vld [vmem:[%s331 + $0xf0] sm:$0xff]
      %v403 = vld [vmem:[%s331 + $0xf8] sm:$0xff]
      %v404 = vld [vmem:[%s331 + $0x100] sm:$0xff]
      %v405 = vld [vmem:[%s331 + $0x108] sm:$0x77]
      %v406 = vld [vmem:[%s341] sm:$0xff]
      %v407 = vld [vmem:[%s341 + $0x8] sm:$0xff]
      %v408 = vld [vmem:[%s341 + $0x10] sm:$0xff]
      %v409 = vld [vmem:[%s341 + $0x18] sm:$0xff]
      %v410 = vld [vmem:[%s341 + $0x20] sm:$0xff]
      %v411 = vld [vmem:[%s341 + $0x28] sm:$0xff]
      %v412 = vld [vmem:[%s341 + $0x30] sm:$0x3f]
      %v413 = vld [vmem:[%s341 + $0x38] sm:$0x3f]
      %v422 = vunpack.c.l.b16 %v364
      %v423 = vunpack.c.h.b16 %v364
      %v424 = vunpack.c.l.b16 %v365
      %v425 = vunpack.c.l.b16 %v366
      %v426 = vunpack.c.h.b16 %v366
      %v427 = vunpack.c.l.b16 %v367
      %v428 = vunpack.c.l.b16 %v368
      %v429 = vunpack.c.h.b16 %v368
      %v430 = vunpack.c.l.b16 %v369
      %v431 = vunpack.c.l.b16 %v370
      %v432 = vunpack.c.h.b16 %v370
      %v433 = vunpack.c.l.b16 %v371
      %v434 = vpack.c.b16 %v425, %v422
      %v435 = vpack.c.b16 %v426, %v423
      %v436 = vpack.c.b16 %v427, %v424
      %v437 = vpack.c.b16 %v431, %v428
      %v438 = vpack.c.b16 %v432, %v429
      %v439 = vpack.c.b16 %v433, %v430
      %v478 = vunpack.c.l.b16 %v372
      %v479 = vunpack.c.h.b16 %v372
      %v480 = vunpack.c.l.b16 %v373
      %v481 = vunpack.c.h.b16 %v373
      %v482 = vunpack.c.l.b16 %v374
      %v483 = vunpack.c.h.b16 %v374
      %v484 = vunpack.c.l.b16 %v375
      %v485 = vunpack.c.h.b16 %v375
      %v486 = vunpack.c.l.b16 %v376
      %v487 = vunpack.c.h.b16 %v376
      %v488 = vunpack.c.l.b16 %v377
      %v489 = vunpack.c.h.b16 %v377
      %v490 = vunpack.c.l.b16 %v378
      %v491 = vunpack.c.h.b16 %v378
      %v492 = vunpack.c.l.b16 %v379
      %v493 = vunpack.c.h.b16 %v379
      %v494 = vunpack.c.l.b16 %v380
      %v495 = vunpack.c.h.b16 %v380
      %v496 = vunpack.c.l.b16 %v381
      %v497 = vunpack.c.h.b16 %v381
      %v498 = vunpack.c.l.b16 %v382
      %v499 = vunpack.c.h.b16 %v382
      %v500 = vunpack.c.l.b16 %v383
      %v501 = vunpack.c.h.b16 %v383
      %v502 = vunpack.c.l.b16 %v384
      %v503 = vunpack.c.h.b16 %v384
      %v504 = vunpack.c.l.b16 %v385
      %v505 = vunpack.c.h.b16 %v385
      %v506 = vunpack.c.l.b16 %v386
      %v507 = vunpack.c.h.b16 %v386
      %v508 = vunpack.c.l.b16 %v387
      %v509 = vunpack.c.h.b16 %v387
      %v510 = vunpack.c.l.b16 %v388
      %v511 = vunpack.c.h.b16 %v388
      %v512 = vunpack.c.l.b16 %v389
      %v513 = vunpack.c.h.b16 %v389
      %v514 = vunpack.c.l.b16 %v390
      %v515 = vunpack.c.h.b16 %v390
      %v516 = vunpack.c.l.b16 %v391
      %v517 = vunpack.c.h.b16 %v391
      %v518 = vunpack.c.l.b16 %v392
      %v519 = vunpack.c.h.b16 %v392
      %v520 = vunpack.c.l.b16 %v393
      %v521 = vunpack.c.h.b16 %v393
      %v522 = vunpack.c.l.b16 %v394
      %v523 = vunpack.c.h.b16 %v394
      %v524 = vunpack.c.l.b16 %v395
      %v525 = vunpack.c.h.b16 %v395
      %v526 = vunpack.c.l.b16 %v396
      %v527 = vunpack.c.h.b16 %v396
      %v528 = vunpack.c.l.b16 %v397
      %v529 = vunpack.c.h.b16 %v397
      %v530 = vunpack.c.l.b16 %v398
      %v531 = vunpack.c.h.b16 %v398
      %v532 = vunpack.c.l.b16 %v399
      %v533 = vunpack.c.h.b16 %v399
      %v534 = vunpack.c.l.b16 %v400
      %v535 = vunpack.c.h.b16 %v400
      %v536 = vunpack.c.l.b16 %v401
      %v537 = vunpack.c.h.b16 %v401
      %v538 = vunpack.c.l.b16 %v402
      %v539 = vunpack.c.h.b16 %v402
      %v540 = vunpack.c.l.b16 %v403
      %v541 = vunpack.c.h.b16 %v403
      %v542 = vunpack.c.l.b16 %v404
      %v543 = vunpack.c.h.b16 %v404
      %v544 = vunpack.c.l.b16 %v405
      %v545 = vunpack.c.h.b16 %v405
      %v546 = vpack.c.b16 %v480, %v478
      %v547 = vpack.c.b16 %v481, %v479
      %v548 = vpack.c.b16 %v484, %v482
      %v549 = vpack.c.b16 %v485, %v483
      %v550 = vpack.c.b16 %v488, %v486
      %v551 = vpack.c.b16 %v489, %v487
      %v552 = vpack.c.b16 %v492, %v490
      %v553 = vpack.c.b16 %v493, %v491
      %v554 = vpack.c.b16 %v496, %v494
      %v555 = vpack.c.b16 %v497, %v495
      %v556 = vpack.c.b16 %v500, %v498
      %v557 = vpack.c.b16 %v501, %v499
      %v558 = vpack.c.b16 %v504, %v502
      %v559 = vpack.c.b16 %v505, %v503
      %v560 = vpack.c.b16 %v508, %v506
      %v561 = vpack.c.b16 %v509, %v507
      %v562 = vpack.c.b16 %v512, %v510
      %v563 = vpack.c.b16 %v513, %v511
      %v564 = vpack.c.b16 %v516, %v514
      %v565 = vpack.c.b16 %v517, %v515
      %v566 = vpack.c.b16 %v520, %v518
      %v567 = vpack.c.b16 %v521, %v519
      %v568 = vpack.c.b16 %v524, %v522
      %v569 = vpack.c.b16 %v525, %v523
      %v570 = vpack.c.b16 %v528, %v526
      %v571 = vpack.c.b16 %v529, %v527
      %v572 = vpack.c.b16 %v532, %v530
      %v573 = vpack.c.b16 %v533, %v531
      %v574 = vpack.c.b16 %v536, %v534
      %v575 = vpack.c.b16 %v537, %v535
      %v576 = vpack.c.b16 %v540, %v538
      %v577 = vpack.c.b16 %v541, %v539
      %v578 = vpack.c.b16 %v544, %v542
      %v579 = vpack.c.b16 %v545, %v543
      %vm612 = vcmask 113664
      %v614 = vsel %vm612, %v436, 0
      %v617 = vsel %vm612, %v439, 0
      %vm619 = vcmask 1046528
      %v621 = vsel %vm619, %v578, 0
      %v624 = vsel %vm619, %v579, 0
      %626 = vmatpush.bf16.msra.mxu0 %v560
      %627 = vmatpush.bf16.msra.mxu0 %v558
      %628 = vmatpush.bf16.msra.mxu0 %v556
      %629 = vmatpush.bf16.msra.mxu0 %v554
      %630 = vmatpush.bf16.msra.mxu0 %v552
      %631 = vmatpush.bf16.msra.mxu0 %v550
      %632 = vmatpush.bf16.msra.mxu0 %v548
      %633 = vmatpush.bf16.msra.mxu0 %v546
      %634 = vmatmul.bf16.gmra.mxu0 %v434
      %v635 = vpop.f32.mrf.mxu0
      %v636 = vadd.f32 %v406, %v635
      %v637 = vpop.f32.mrf.mxu0
      %v638 = vadd.f32 %v408, %v637
      %639 = vmatmul.bf16.gmra.mxu0 %v437
      %v640 = vpop.f32.mrf.mxu0
      %v641 = vadd.f32 %v410, %v640
      %v642 = vpop.f32.mrf.mxu0
      %v643 = vadd.f32 %v412, %v642
      %644 = vdwg.mxu0
      %645 = vmatpush.bf16.msra.mxu0 %v576
      %646 = vmatpush.bf16.msra.mxu0 %v574
      %647 = vmatpush.bf16.msra.mxu0 %v572
      %648 = vmatpush.bf16.msra.mxu0 %v570
      %649 = vmatpush.bf16.msra.mxu0 %v568
      %650 = vmatpush.bf16.msra.mxu0 %v566
      %651 = vmatpush.bf16.msra.mxu0 %v564
      %652 = vmatpush.bf16.msra.mxu0 %v562
      %653 = vmatmul.bf16.gmra.mxu0 %v435
      %v654 = vpop.f32.mrf.mxu0
      %v655 = vadd.f32 %v636, %v654
      %v656 = vpop.f32.mrf.mxu0
      %v657 = vadd.f32 %v638, %v656
      %658 = vmatmul.bf16.gmra.mxu0 %v438
      %v659 = vpop.f32.mrf.mxu0
      %v660 = vadd.f32 %v641, %v659
      %v661 = vpop.f32.mrf.mxu0
      %v662 = vadd.f32 %v643, %v661
      %663 = vdwg.mxu0
      %664 = vmatpush.bf16.msra.mxu0 0
      %665 = vmatpush.bf16.msra.mxu0 0
      %666 = vmatpush.bf16.msra.mxu0 0
      %667 = vmatpush.bf16.msra.mxu0 0
      %668 = vmatpush.bf16.msra.mxu0 0
      %669 = vmatpush.bf16.msra.mxu0 0
      %670 = vmatpush.bf16.msra.mxu0 0
      %671 = vmatpush.bf16.msra.mxu0 %v621
      %672 = vmatmul.bf16.gmra.mxu0 %v614
      %v673 = vpop.f32.mrf.mxu0
      %v674 = vadd.f32 %v655, %v673
      %v675 = vpop.f32.mrf.mxu0
      %v676 = vadd.f32 %v657, %v675
      %677 = vmatmul.bf16.gmra.mxu0 %v617
      %v678 = vpop.f32.mrf.mxu0
      %v679 = vadd.f32 %v660, %v678
      %v680 = vpop.f32.mrf.mxu0
      %v681 = vadd.f32 %v662, %v680
      %682 = vdwg.mxu0
      %683 = vmatpush.bf16.msra.mxu0 %v561
      %684 = vmatpush.bf16.msra.mxu0 %v559
      %685 = vmatpush.bf16.msra.mxu0 %v557
      %686 = vmatpush.bf16.msra.mxu0 %v555
      %687 = vmatpush.bf16.msra.mxu0 %v553
      %688 = vmatpush.bf16.msra.mxu0 %v551
      %689 = vmatpush.bf16.msra.mxu0 %v549
      %690 = vmatpush.bf16.msra.mxu0 %v547
      %691 = vmatmul.bf16.gmra.mxu0 %v434
      %v692 = vpop.f32.mrf.mxu0
      %v693 = vadd.f32 %v407, %v692
      %v694 = vpop.f32.mrf.mxu0
      %v695 = vadd.f32 %v409, %v694
      %696 = vmatmul.bf16.gmra.mxu0 %v437
      %v697 = vpop.f32.mrf.mxu0
      %v698 = vadd.f32 %v411, %v697
      %v699 = vpop.f32.mrf.mxu0
      %v700 = vadd.f32 %v413, %v699
      %701 = vdwg.mxu0
      %702 = vmatpush.bf16.msra.mxu0 %v577
      %703 = vmatpush.bf16.msra.mxu0 %v575
      %704 = vmatpush.bf16.msra.mxu0 %v573
      %705 = vmatpush.bf16.msra.mxu0 %v571
      %706 = vmatpush.bf16.msra.mxu0 %v569
      %707 = vmatpush.bf16.msra.mxu0 %v567
      %708 = vmatpush.bf16.msra.mxu0 %v565
      %709 = vmatpush.bf16.msra.mxu0 %v563
      %710 = vmatmul.bf16.gmra.mxu0 %v435
      %v711 = vpop.f32.mrf.mxu0
      %v712 = vadd.f32 %v693, %v711
      %v713 = vpop.f32.mrf.mxu0
      %v714 = vadd.f32 %v695, %v713
      %715 = vmatmul.bf16.gmra.mxu0 %v438
      %v716 = vpop.f32.mrf.mxu0
      %v717 = vadd.f32 %v698, %v716
      %v718 = vpop.f32.mrf.mxu0
      %v719 = vadd.f32 %v700, %v718
      %720 = vdwg.mxu0
      %721 = vmatpush.bf16.msra.mxu0 0
      %722 = vmatpush.bf16.msra.mxu0 0
      %723 = vmatpush.bf16.msra.mxu0 0
      %724 = vmatpush.bf16.msra.mxu0 0
      %725 = vmatpush.bf16.msra.mxu0 0
      %726 = vmatpush.bf16.msra.mxu0 0
      %727 = vmatpush.bf16.msra.mxu0 0
      %728 = vmatpush.bf16.msra.mxu0 %v624
      %729 = vmatmul.bf16.gmra.mxu0 %v614
      %v730 = vpop.f32.mrf.mxu0
      %v731 = vadd.f32 %v712, %v730
      %v732 = vpop.f32.mrf.mxu0
      %v733 = vadd.f32 %v714, %v732
      %734 = vmatmul.bf16.gmra.mxu0 %v617
      %v735 = vpop.f32.mrf.mxu0
      %v736 = vadd.f32 %v717, %v735
      %v737 = vpop.f32.mrf.mxu0
      %v738 = vadd.f32 %v719, %v737
      %739 = vdwg.mxu0
      %v740 = vld [vmem:[%s3] sm:$0xff]
      %v741 = vld [vmem:[%s3 + $0x8] sm:$0xff]
      %v742 = vld [vmem:[%s3 + $0x10] sm:$0xff]
      %v743 = vld [vmem:[%s3 + $0x18] sm:$0x3f]
      %745 = vset.pattern.permute.xlu0 0
      %746 = vperm.xlu0 %745, %v740
      %v747 = vpop.permute.xlu0 %746
      %750 = vset.pattern.permute.xlu0 0
      %751 = vperm.xlu0 %750, %v741
      %v752 = vpop.permute.xlu0 %751
      %755 = vset.pattern.permute.xlu0 0
      %756 = vperm.xlu0 %755, %v742
      %v757 = vpop.permute.xlu0 %756
      %760 = vset.pattern.permute.xlu0 0
      %761 = vperm.xlu0 %760, %v743
      %v762 = vpop.permute.xlu0 %761
      %v764 = vadd.f32 %v674, %v747
      %v765 = vadd.f32 %v731, %v747
      %v766 = vadd.f32 %v676, %v752
      %v767 = vadd.f32 %v733, %v752
      %v768 = vadd.f32 %v679, %v757
      %v769 = vadd.f32 %v736, %v757
      %v770 = vadd.f32 %v681, %v762
      %v771 = vadd.f32 %v738, %v762
      %vm772 = vcmp.ge.f32.partialorder %v764, 0.0
      %vm773 = vcmp.ge.f32.partialorder %v765, 0.0
      %vm774 = vcmp.ge.f32.partialorder %v766, 0.0
      %vm775 = vcmp.ge.f32.partialorder %v767, 0.0
      %vm776 = vcmp.ge.f32.partialorder %v768, 0.0
      %vm777 = vcmp.ge.f32.partialorder %v769, 0.0
      %vm778 = vcmp.ge.f32.partialorder %v770, 0.0
      %vm779 = vcmp.ge.f32.partialorder %v771, 0.0
      %v780 = vld [vmem:[%s4] sm:$0xff]
      %v781 = vld [vmem:[%s4 + $0x8] sm:$0xff]
      %v782 = vld [vmem:[%s4 + $0x10] sm:$0xff]
      %v783 = vld [vmem:[%s4 + $0x18] sm:$0x3f]
      %785 = vset.pattern.permute.xlu0 0
      %786 = vperm.xlu0 %785, %v780
      %v787 = vpop.permute.xlu0 %786
      %790 = vset.pattern.permute.xlu0 0
      %791 = vperm.xlu0 %790, %v781
      %v792 = vpop.permute.xlu0 %791
      %795 = vset.pattern.permute.xlu0 0
      %796 = vperm.xlu0 %795, %v782
      %v797 = vpop.permute.xlu0 %796
      %800 = vset.pattern.permute.xlu0 0
      %801 = vperm.xlu0 %800, %v783
      %v802 = vpop.permute.xlu0 %801
      %v804 = vmul.f32 %v787, %v764
      %v805 = vmul.f32 %v787, %v765
      %v806 = vmul.f32 %v792, %v766
      %v807 = vmul.f32 %v792, %v767
      %v808 = vmul.f32 %v797, %v768
      %v809 = vmul.f32 %v797, %v769
      %v810 = vmul.f32 %v802, %v770
      %v811 = vmul.f32 %v802, %v771
      %v812 = vsel %vm772, %v764, %v804
      %v813 = vsel %vm773, %v765, %v805
      %v814 = vsel %vm774, %v766, %v806
      %v815 = vsel %vm775, %v767, %v807
      %v816 = vsel %vm776, %v768, %v808
      %v817 = vsel %vm777, %v769, %v809
      %v818 = vsel %vm778, %v770, %v810
      %v819 = vsel %vm779, %v771, %v811
      %820 = vst [vmem:[%s361] sm:$0xff] %v812
      %821 = vst [vmem:[%s361 + $0x8] sm:$0xff] %v813
      %822 = vst [vmem:[%s361 + $0x10] sm:$0xff] %v814
      %823 = vst [vmem:[%s361 + $0x18] sm:$0xff] %v815
      %824 = vst [vmem:[%s361 + $0x20] sm:$0xff] %v816
      %825 = vst [vmem:[%s361 + $0x28] sm:$0xff] %v817
      %826 = vst [vmem:[%s361 + $0x30] sm:$0x3f] %v818
      %827 = vst [vmem:[%s361 + $0x38] sm:$0x3f] %v819
      %v828 = vld [vmem:[%s351] sm:$0xff]
      %v829 = vld [vmem:[%s351 + $0x8] sm:$0xff]
      %v830 = vld [vmem:[%s351 + $0x10] sm:$0xff]
      %v831 = vld [vmem:[%s351 + $0x18] sm:$0xff]
      %v832 = vld [vmem:[%s351 + $0x20] sm:$0xff]
      %v833 = vld [vmem:[%s351 + $0x28] sm:$0xff]
      %v834 = vld [vmem:[%s351 + $0x30] sm:$0x3f]
      %v835 = vld [vmem:[%s351 + $0x38] sm:$0x3f]
      %s836 = scalar_lea.vmem %s361, 64
      %837 = vst [vmem:[%s836] sm:$0xff] %v828
      %838 = vst [vmem:[%s836 + $0x8] sm:$0xff] %v829
      %839 = vst [vmem:[%s836 + $0x10] sm:$0xff] %v830
      %840 = vst [vmem:[%s836 + $0x18] sm:$0xff] %v831
      %841 = vst [vmem:[%s836 + $0x20] sm:$0xff] %v832
      %842 = vst [vmem:[%s836 + $0x28] sm:$0xff] %v833
      %843 = vst [vmem:[%s836 + $0x30] sm:$0x3f] %v834
      %844 = vst [vmem:[%s836 + $0x38] sm:$0x3f] %v835
      %s845 = smul.u32 2, %s22
      %p846 = scmp.lt.s32.totalorder %s21, 1
      %s847 = scalar_select %p846, %s21, 1
      %p848 = scmp.lt.s32.totalorder %s845, 1
      %s849 = scalar_select %p848, %s845, 1
      %s850 = smul.addr %s847, 16
      %s851 = sadd.s32 %s849, %s850
      %s852 = smul.addr %s851, 8
      %s853 = scalar_lea.vmem %s6, %s852
      // Predicated region
      $region45: #{_lambda_.5} parent=43 // pred_check
        %p854 = pneg %p196
      $region46: #{_lambda_.5} parent=43 // pred_check_branch
        %856 = sbr.rel (%p854) target = $region48
      $region47: #{_lambda_.5} parent=43 // pred_region
        %s857 = smul.u32 2, %s22
      $region48: #{_lambda_.5} parent=43 // pred_fallthru
        _
    $region44: #{_lambda_.5} parent=5 // pred_fallthru
      _
    %p858 = scmp.le.s32.totalorder 2, %s12
    // Predicated region
    $region49: #{_lambda_.5} parent=5 // pred_check
      %p859 = pneg %p858
    $region50: #{_lambda_.5} parent=5 // pred_check_branch
      %861 = sbr.rel (%p859) target = $region52
    $region51: #{_lambda_.5} parent=5 // pred_region
      %s862 = ssub.s32 %s12, 2
      // Predicated region
      $region53: #{_lambda_.5} parent=51 // pred_check
        %p863 = pneg %p202
      $region54: #{_lambda_.5} parent=51 // pred_check_branch
        %865 = sbr.rel (%p863) target = $region56
      $region55: #{_lambda_.5} parent=51 // pred_region
        %s866 = smul.u32 2, %s24
        %p867 = scmp.lt.s32.totalorder %s23, 1
        %s868 = scalar_select %p867, %s23, 1
        %p869 = scmp.lt.s32.totalorder %s866, 1
        %s870 = scalar_select %p869, %s866, 1
        %s871 = smul.addr %s868, 16
        %s872 = sadd.s32 %s870, %s871
        %s873 = smul.addr %s872, 8
        %s874 = scalar_lea.vmem %s6, %s873
      $region56: #{_lambda_.5} parent=51 // pred_fallthru
        _
    $region52: #{_lambda_.5} parent=5 // pred_fallthru
      _
  $region6: #{_lambda_.5} parent=0 // loop_footer
    %s16 = sadd.s32 1, %s12
  $region7: #{_lambda_.5} parent=0 // loop_footer_branch
    %11 = sbr.rel target = $region3
  $region8: #{_lambda_.5} parent=0 // loop_exit
    _

</llo_original>
